<compile_context>
chip_gen: v7x
topology: tpu7x:2x2x1
jax: 0.10.0
libtpu: 0.0.40
codegen_flags: <defaults>
</compile_context>

<pallas_src>
import functools

import jax
import jax.numpy as jnp
from jax import lax
from jax.experimental import pallas as pl
from jax.experimental.pallas import tpu as pltpu

BN_EPS = 1e-5


def traj_tcn_kernel(x_ref, wm_ref, bm_ref, cw_ref, scale_ref, shift_ref,
                    o_ref, *, num_layers, block_b, seq_len_pad, seq_len):
    """Fused mapper-Linear + num_layers x (Conv1d k3 p1 no-bias -> BN -> ReLU).

    x_ref:     (block_b, Tp, P) f32   input trajectory features (batch block)
    wm_ref:    (P, D)           bf16  mapper weight, transposed (in -> out)
    bm_ref:    (1, D)           f32   mapper bias
    cw_ref:    (L, D, 3D)       bf16  conv weights; taps [t-1 | t | t+1] along N
    scale_ref: (L, D)           f32   folded BN scale  (gamma * rsqrt(var+eps))
    shift_ref: (L, D)           f32   folded BN shift  (beta - mean * scale)
    o_ref:     (block_b, Tp, D) f32   output features
    """
    M = block_b * seq_len_pad
    P = x_ref.shape[-1]
    D = o_ref.shape[-1]

    # mapper: Linear(init_planes -> dim); K = P is tiny, bf16 MXU + f32 acc.
    x = x_ref[...].reshape(M, P).astype(jnp.bfloat16)
    h = jnp.dot(x, wm_ref[...], preferred_element_type=jnp.float32) + bm_ref[...]

    # Per-row masks marking the first / last *valid* time step of each batch
    # element inside the flattened (M, D) block.  This realizes Conv1d's
    # zero-padding, prevents leakage across batch elements at roll wrap-around,
    # and keeps padded time rows (t >= seq_len) from feeding valid rows.
    t_idx = lax.broadcasted_iota(jnp.int32, (block_b, seq_len_pad, 1), 1)
    is_first = (t_idx == 0).reshape(M, 1)
    is_last = (t_idx == seq_len - 1).reshape(M, 1)

    for l in range(num_layers):
        h_b = h.astype(jnp.bfloat16)                     # single cast per layer
        # One wide MXU matmul: (M, D) x (D, 3D) -> (M, 3D), f32 accumulation.
        z = jnp.dot(h_b, cw_ref[l], preferred_element_type=jnp.float32)
        # matmul-then-shift: roll the per-tap lane groups on the XLU and mask.
        y = z[:, D:2 * D]                                                  # x[t]
        y = y + jnp.where(is_first, 0.0, pltpu.roll(z[:, :D], 1, axis=0))  # x[t-1]
        y = y + jnp.where(is_last, 0.0,
                          pltpu.roll(z[:, 2 * D:], M - 1, axis=0))         # x[t+1]
        # folded BatchNorm1d (eval) + ReLU
        h = jnp.maximum(y * scale_ref[l, :] + shift_ref[l, :], 0.0)

    o_ref[...] = h.reshape(block_b, seq_len_pad, D).astype(o_ref.dtype)


def _tpu_info_attr(names, default):
    try:
        info = pltpu.get_tpu_info()
    except Exception:
        return default
    for n in names:
        v = getattr(info, n, None)
        if v:
            return v
    return default


def traj_model_tcn(x, params, *, num_layers, block_b=None):
    """x: (B, T, init_planes) float32 -> {'sgn_feature': (B, T, dim)}"""
    B, T, P = x.shape
    D = params["bm"].shape[-1]
    L = num_layers

    # Pad the time axis to a sublane multiple of 8; masks inside the kernel use
    # the true T, so padded rows never influence valid outputs.
    Tp = ((T + 7) // 8) * 8
    if Tp != T:
        x = jnp.pad(x, ((0, 0), (0, Tp - T), (0, 0)))

    n_cores = int(_tpu_info_attr(
        ("num_tensorcores", "tensorcores_per_chip", "num_cores"), 1))
    vmem_physical = int(_tpu_info_attr(("vmem_capacity_bytes",), 128 << 20))

    if block_b is None:
        # Target >= 1024 matmul rows (M = block_b * Tp) per grid step ...
        block_b = max(1, min(B, pl.cdiv(1024, Tp)))
        # ... bounded so per-step activations/temporaries stay well within VMEM.
        max_rows = max(Tp, (vmem_physical // 4) // (4 * (P + 6 * D)))
        block_b = max(1, min(block_b, max_rows // Tp))
        # Only force >= n_cores grid steps when the chip actually has multiple
        # TensorCores (v7x); on single-TC chips (v5e/v6e) the grid is a serial
        # loop and extra steps are pure per-step overhead.
        if n_cores > 1 and B >= n_cores and pl.cdiv(B, block_b) < n_cores:
            block_b = pl.cdiv(B, n_cores)
    nb = pl.cdiv(B, block_b)
    BP = nb * block_b
    if BP != B:
        x = jnp.pad(x, ((0, BP - B), (0, 0), (0, 0)))
    assert BP % block_b == 0 and x.shape == (BP, Tp, P)

    kernel = functools.partial(traj_tcn_kernel, num_layers=L, block_b=block_b,
                               seq_len_pad=Tp, seq_len=T)

    args = (x, params["wm"], params["bm"], params["cw"],
            params["scale"], params["shift"])
    param_bytes = sum(int(p.size) * p.dtype.itemsize for p in args[1:])
    act_bytes = block_b * Tp * (P + D) * 4          # in + out blocks (per buffer)
    work_bytes = block_b * Tp * (6 * D) * 4         # in-kernel f32 temporaries
    vmem_limit = int(min(max(2 * (param_bytes + act_bytes) + work_bytes + (8 << 20),
                             32 << 20),
                         (vmem_physical * 3) // 4))

    flops = 2 * BP * Tp * D * (P + 3 * L * D)
    bytes_accessed = int(BP * Tp * (P + D) * 4 + param_bytes)

    def build(single_buffer_params):
        pk = {}
        if single_buffer_params and hasattr(pl, "Buffered"):
            # grid-invariant params: no need for double-buffered VMEM footprint.
            pk = dict(pipeline_mode=pl.Buffered(1))
        return pl.pallas_call(
            kernel,
            out_shape=jax.ShapeDtypeStruct((BP, Tp, D), jnp.float32),
            grid=(nb,),
            in_specs=[
                pl.BlockSpec((block_b, Tp, P), lambda b: (b, 0, 0)),       # x
                pl.BlockSpec((P, D), lambda b: (0, 0), **pk),              # mapper W^T (bf16)
                pl.BlockSpec((1, D), lambda b: (0, 0), **pk),              # mapper bias
                pl.BlockSpec((L, D, 3 * D), lambda b: (0, 0, 0), **pk),    # fused conv taps (bf16)
                pl.BlockSpec((L, D), lambda b: (0, 0), **pk),              # folded BN scale
                pl.BlockSpec((L, D), lambda b: (0, 0), **pk),              # folded BN shift
            ],
            out_specs=pl.BlockSpec((block_b, Tp, D), lambda b: (b, 0, 0)),
            compiler_params=pltpu.CompilerParams(
                dimension_semantics=("parallel",),
                vmem_limit_bytes=vmem_limit),
            cost_estimate=pl.CostEstimate(flops=flops, transcendentals=0,
                                          bytes_accessed=bytes_accessed),
        )

    try:
        out = jax.block_until_ready(build(True)(*args))
    except Exception:
        # Fallback if this JAX build rejects pipeline_mode=pl.Buffered(1).
        out = jax.block_until_ready(build(False)(*args))

    return {"sgn_feature": out[:B, :T]}


def make_params(key, init_planes, dim, num_layers):
    """Deterministic synthetic parameters matching the PyTorch module shapes."""
    ks = jax.random.split(key, 7)
    # nn.Linear(init_planes, dim): weight (dim, init_planes), bias (dim,)
    w_lin = jax.random.normal(ks[0], (dim, init_planes), jnp.float32) * 0.1
    b_lin = jax.random.normal(ks[1], (dim,), jnp.float32) * 0.1
    # nn.Conv1d(dim, dim, 3, bias=False): weight (dim, dim, 3) per layer
    w_conv = jax.random.normal(ks[2], (num_layers, dim, dim, 3), jnp.float32) * 0.05
    gamma = 1.0 + 0.1 * jax.random.normal(ks[3], (num_layers, dim), jnp.float32)
    beta = 0.1 * jax.random.normal(ks[4], (num_layers, dim), jnp.float32)
    mean = 0.1 * jax.random.normal(ks[5], (num_layers, dim), jnp.float32)
    var = 0.5 + jax.random.uniform(ks[6], (num_layers, dim), jnp.float32)

    # Fold eval-mode BatchNorm into per-layer scale/shift.
    scale = gamma * lax.rsqrt(var + BN_EPS)
    shift = beta - mean * scale

    # Conv taps: (L, O, I, K) -> per-tap (L, I, O), stacked along N -> (L, D, 3D).
    taps = [jnp.transpose(w_conv[:, :, :, k], (0, 2, 1)) for k in range(3)]
    cw = jnp.concatenate(taps, axis=-1).astype(jnp.bfloat16)

    params = {
        "wm": jnp.transpose(w_lin).astype(jnp.bfloat16),  # (P, D) in -> out
        "bm": b_lin.reshape(1, dim),                      # (1, D) f32
        "cw": cw,                                         # (L, D, 3D) bf16
        "scale": scale, "shift": shift,
    }
    raw = {"w_lin": w_lin, "b_lin": b_lin, "w_conv": w_conv,
           "gamma": gamma, "beta": beta, "mean": mean, "var": var}
    return params, raw


def reference_forward(x, raw, *, num_layers):
    """Plain-JAX f32 reference mirroring the PyTorch 'tcn' forward."""
    h = x @ raw["w_lin"].T + raw["b_lin"]                 # (B, T, D)
    h = jnp.transpose(h, (0, 2, 1))                       # (B, D, T) == PyTorch NCL
    for l in range(num_layers):
        h = lax.conv_general_dilated(
            h, raw["w_conv"][l], window_strides=(1,), padding=[(1, 1)],
            dimension_numbers=("NCH", "OIH", "NCH"))
        inv = lax.rsqrt(raw["var"][l] + BN_EPS)
        h = ((h - raw["mean"][l][None, :, None]) * (inv * raw["gamma"][l])[None, :, None]
             + raw["beta"][l][None, :, None])
        h = jnp.maximum(h, 0.0)
    return jnp.transpose(h, (0, 2, 1))                    # back to (B, T, D)


if __name__ == "__main__":
    B, T, init_planes, dim, num_layers = 4, 16, 4, 128, 3

    key = jax.random.PRNGKey(0)
    kx, kp = jax.random.split(key)
    x = jax.random.normal(kx, (B, T, init_planes), jnp.float32)
    params, raw = make_params(kp, init_planes, dim, num_layers)

    out = traj_model_tcn(x, params, num_layers=num_layers)
    feat = jax.block_until_ready(out["sgn_feature"])

    ref = reference_forward(x, raw, num_layers=num_layers)
    assert feat.shape == (B, T, dim)
    # bf16 MXU inputs (f32 accumulation): compare with a bf16-appropriate bound.
    max_ref = float(jnp.max(jnp.abs(ref)))
    max_err = float(jnp.max(jnp.abs(feat - ref)))
    assert max_err <= 3e-2 * (max_ref + 1.0), (
        f"mismatch vs reference: max_err={max_err}, max_ref={max_ref}")

    print("KERNEL_OK")
</pallas_src>

<mosaic_0001>
module attributes {stable_mosaic.version = 11 : i64} {
  func.func @traj_tcn_kernel(%arg0: i32, %arg1: memref<4x16x4xf32, #tpu.memory_space<vmem>>, %arg2: memref<4x128xbf16, #tpu.memory_space<vmem>>, %arg3: memref<1x128xf32, #tpu.memory_space<vmem>>, %arg4: memref<3x128x384xbf16, #tpu.memory_space<vmem>>, %arg5: memref<3x128xf32, #tpu.memory_space<vmem>>, %arg6: memref<3x128xf32, #tpu.memory_space<vmem>>, %arg7: memref<4x16x128xf32, #tpu.memory_space<vmem>>) attributes {dimension_semantics = [#tpu.dimension_semantics<parallel>], iteration_bounds = array<i64: 1>, scalar_prefetch = 0 : i64, scratch_operands = 0 : i64, tpu.core_type = #tpu.core_type<tc>, window_params = [{transform_indices = @transform_0, window_bounds = array<i64: 4, 16, 4>}, {pipeline_mode = #tpu.pipeline_mode<synchronous>, transform_indices = @transform_1, window_bounds = array<i64: 4, 128>}, {pipeline_mode = #tpu.pipeline_mode<synchronous>, transform_indices = @transform_2, window_bounds = array<i64: 1, 128>}, {pipeline_mode = #tpu.pipeline_mode<synchronous>, transform_indices = @transform_3, window_bounds = array<i64: 3, 128, 384>}, {pipeline_mode = #tpu.pipeline_mode<synchronous>, transform_indices = @transform_4, window_bounds = array<i64: 3, 128>}, {pipeline_mode = #tpu.pipeline_mode<synchronous>, transform_indices = @transform_5, window_bounds = array<i64: 3, 128>}, {transform_indices = @transform_6, window_bounds = array<i64: 4, 16, 128>}]} {
    %c0 = arith.constant 0 : index
    %c0_0 = arith.constant 0 : index
    %c0_1 = arith.constant 0 : index
    %0 = vector.load %arg1[%c0, %c0_0, %c0_1] : memref<4x16x4xf32, #tpu.memory_space<vmem>>, vector<4x16x4xf32>
    %1 = vector.shape_cast %0 : vector<4x16x4xf32> to vector<64x4xf32>
    %2 = arith.truncf %1 : vector<64x4xf32> to vector<64x4xbf16>
    %c0_2 = arith.constant 0 : index
    %c0_3 = arith.constant 0 : index
    %3 = vector.load %arg2[%c0_2, %c0_3] : memref<4x128xbf16, #tpu.memory_space<vmem>>, vector<4x128xbf16>
    %cst = arith.constant dense<0.000000e+00> : vector<64x128xf32>
    %4 = tpu.matmul %2, %3, %cst {dimension_numbers = #tpu.dot_dimension_numbers<[1], [0], [0], [1], [0, 0, 1, 1], [], []>} : vector<64x4xbf16>, vector<4x128xbf16>, vector<64x128xf32> -> vector<64x128xf32>
    %c0_4 = arith.constant 0 : index
    %c0_5 = arith.constant 0 : index
    %5 = vector.load %arg3[%c0_4, %c0_5] : memref<1x128xf32, #tpu.memory_space<vmem>>, vector<1x128xf32>
    %6 = vector.broadcast %5 : vector<1x128xf32> to vector<64x128xf32>
    %7 = arith.addf %4, %6 : vector<64x128xf32>
    %8 = tpu.iota {dimensions = array<i32: 1>} : vector<4x16x1xi32>
    %c0_i32 = arith.constant 0 : i32
    %9 = vector.broadcast %c0_i32 : i32 to vector<4x16x1xi32>
    %10 = arith.cmpi eq, %8, %9 : vector<4x16x1xi32>
    %11 = vector.shape_cast %10 : vector<4x16x1xi1> to vector<64x1xi1>
    %c15_i32 = arith.constant 15 : i32
    %12 = vector.broadcast %c15_i32 : i32 to vector<4x16x1xi32>
    %13 = arith.cmpi eq, %8, %12 : vector<4x16x1xi32>
    %14 = vector.shape_cast %13 : vector<4x16x1xi1> to vector<64x1xi1>
    %15 = arith.truncf %7 : vector<64x128xf32> to vector<64x128xbf16>
    %c0_6 = arith.constant 0 : index
    %c0_7 = arith.constant 0 : index
    %c0_8 = arith.constant 0 : index
    %16 = vector.load %arg4[%c0_6, %c0_7, %c0_8] : memref<3x128x384xbf16, #tpu.memory_space<vmem>>, vector<1x128x384xbf16>
    %17 = vector.shape_cast %16 : vector<1x128x384xbf16> to vector<128x384xbf16>
    %cst_9 = arith.constant dense<0.000000e+00> : vector<64x384xf32>
    %18 = tpu.matmul %15, %17, %cst_9 {dimension_numbers = #tpu.dot_dimension_numbers<[1], [0], [0], [1], [0, 0, 1, 1], [], []>} : vector<64x128xbf16>, vector<128x384xbf16>, vector<64x384xf32> -> vector<64x384xf32>
    %19 = vector.extract_strided_slice %18 {offsets = [0, 128], sizes = [64, 128], strides = [1, 1]} : vector<64x384xf32> to vector<64x128xf32>
    %20 = vector.extract_strided_slice %18 {offsets = [0, 0], sizes = [64, 128], strides = [1, 1]} : vector<64x384xf32> to vector<64x128xf32>
    %c1_i32 = arith.constant 1 : i32
    %21 = tpu.dynamic_rotate %20 by %c1_i32 dim 0 : vector<64x128xf32>, i32 -> vector<64x128xf32>
    %cst_10 = arith.constant 0.000000e+00 : f32
    %22 = vector.shape_cast %11 : vector<64x1xi1> to vector<64x1xi1>
    %23 = vector.broadcast %22 : vector<64x1xi1> to vector<64x128xi1>
    %24 = vector.broadcast %cst_10 : f32 to vector<64x128xf32>
    %25 = arith.select %23, %24, %21 : vector<64x128xi1>, vector<64x128xf32>
    %26 = arith.addf %19, %25 : vector<64x128xf32>
    %27 = vector.extract_strided_slice %18 {offsets = [0, 256], sizes = [64, 128], strides = [1, 1]} : vector<64x384xf32> to vector<64x128xf32>
    %c63_i32 = arith.constant 63 : i32
    %28 = tpu.dynamic_rotate %27 by %c63_i32 dim 0 : vector<64x128xf32>, i32 -> vector<64x128xf32>
    %cst_11 = arith.constant 0.000000e+00 : f32
    %29 = vector.shape_cast %14 : vector<64x1xi1> to vector<64x1xi1>
    %30 = vector.broadcast %29 : vector<64x1xi1> to vector<64x128xi1>
    %31 = vector.broadcast %cst_11 : f32 to vector<64x128xf32>
    %32 = arith.select %30, %31, %28 : vector<64x128xi1>, vector<64x128xf32>
    %33 = arith.addf %26, %32 : vector<64x128xf32>
    %c0_12 = arith.constant 0 : index
    %c0_13 = arith.constant 0 : index
    %34 = vector.load %arg5[%c0_12, %c0_13] : memref<3x128xf32, #tpu.memory_space<vmem>>, vector<1x128xf32>
    %35 = vector.shape_cast %34 : vector<1x128xf32> to vector<128xf32>
    %36 = vector.shape_cast %35 : vector<128xf32> to vector<1x128xf32>
    %37 = vector.broadcast %36 : vector<1x128xf32> to vector<64x128xf32>
    %38 = arith.mulf %33, %37 : vector<64x128xf32>
    %c0_14 = arith.constant 0 : index
    %c0_15 = arith.constant 0 : index
    %39 = vector.load %arg6[%c0_14, %c0_15] : memref<3x128xf32, #tpu.memory_space<vmem>>, vector<1x128xf32>
    %40 = vector.shape_cast %39 : vector<1x128xf32> to vector<128xf32>
    %41 = vector.shape_cast %40 : vector<128xf32> to vector<1x128xf32>
    %42 = vector.broadcast %41 : vector<1x128xf32> to vector<64x128xf32>
    %43 = arith.addf %38, %42 : vector<64x128xf32>
    %cst_16 = arith.constant 0.000000e+00 : f32
    %44 = vector.broadcast %cst_16 : f32 to vector<64x128xf32>
    %45 = arith.maximumf %43, %44 : vector<64x128xf32>
    %46 = arith.truncf %45 : vector<64x128xf32> to vector<64x128xbf16>
    %c1 = arith.constant 1 : index
    %c0_17 = arith.constant 0 : index
    %c0_18 = arith.constant 0 : index
    %47 = vector.load %arg4[%c1, %c0_17, %c0_18] : memref<3x128x384xbf16, #tpu.memory_space<vmem>>, vector<1x128x384xbf16>
    %48 = vector.shape_cast %47 : vector<1x128x384xbf16> to vector<128x384xbf16>
    %cst_19 = arith.constant dense<0.000000e+00> : vector<64x384xf32>
    %49 = tpu.matmul %46, %48, %cst_19 {dimension_numbers = #tpu.dot_dimension_numbers<[1], [0], [0], [1], [0, 0, 1, 1], [], []>} : vector<64x128xbf16>, vector<128x384xbf16>, vector<64x384xf32> -> vector<64x384xf32>
    %50 = vector.extract_strided_slice %49 {offsets = [0, 128], sizes = [64, 128], strides = [1, 1]} : vector<64x384xf32> to vector<64x128xf32>
    %51 = vector.extract_strided_slice %49 {offsets = [0, 0], sizes = [64, 128], strides = [1, 1]} : vector<64x384xf32> to vector<64x128xf32>
    %c1_i32_20 = arith.constant 1 : i32
    %52 = tpu.dynamic_rotate %51 by %c1_i32_20 dim 0 : vector<64x128xf32>, i32 -> vector<64x128xf32>
    %cst_21 = arith.constant 0.000000e+00 : f32
    %53 = vector.shape_cast %11 : vector<64x1xi1> to vector<64x1xi1>
    %54 = vector.broadcast %53 : vector<64x1xi1> to vector<64x128xi1>
    %55 = vector.broadcast %cst_21 : f32 to vector<64x128xf32>
    %56 = arith.select %54, %55, %52 : vector<64x128xi1>, vector<64x128xf32>
    %57 = arith.addf %50, %56 : vector<64x128xf32>
    %58 = vector.extract_strided_slice %49 {offsets = [0, 256], sizes = [64, 128], strides = [1, 1]} : vector<64x384xf32> to vector<64x128xf32>
    %c63_i32_22 = arith.constant 63 : i32
    %59 = tpu.dynamic_rotate %58 by %c63_i32_22 dim 0 : vector<64x128xf32>, i32 -> vector<64x128xf32>
    %cst_23 = arith.constant 0.000000e+00 : f32
    %60 = vector.shape_cast %14 : vector<64x1xi1> to vector<64x1xi1>
    %61 = vector.broadcast %60 : vector<64x1xi1> to vector<64x128xi1>
    %62 = vector.broadcast %cst_23 : f32 to vector<64x128xf32>
    %63 = arith.select %61, %62, %59 : vector<64x128xi1>, vector<64x128xf32>
    %64 = arith.addf %57, %63 : vector<64x128xf32>
    %c1_24 = arith.constant 1 : index
    %c0_25 = arith.constant 0 : index
    %65 = vector.load %arg5[%c1_24, %c0_25] : memref<3x128xf32, #tpu.memory_space<vmem>>, vector<1x128xf32>
    %66 = vector.shape_cast %65 : vector<1x128xf32> to vector<128xf32>
    %67 = vector.shape_cast %66 : vector<128xf32> to vector<1x128xf32>
    %68 = vector.broadcast %67 : vector<1x128xf32> to vector<64x128xf32>
    %69 = arith.mulf %64, %68 : vector<64x128xf32>
    %c1_26 = arith.constant 1 : index
    %c0_27 = arith.constant 0 : index
    %70 = vector.load %arg6[%c1_26, %c0_27] : memref<3x128xf32, #tpu.memory_space<vmem>>, vector<1x128xf32>
    %71 = vector.shape_cast %70 : vector<1x128xf32> to vector<128xf32>
    %72 = vector.shape_cast %71 : vector<128xf32> to vector<1x128xf32>
    %73 = vector.broadcast %72 : vector<1x128xf32> to vector<64x128xf32>
    %74 = arith.addf %69, %73 : vector<64x128xf32>
    %cst_28 = arith.constant 0.000000e+00 : f32
    %75 = vector.broadcast %cst_28 : f32 to vector<64x128xf32>
    %76 = arith.maximumf %74, %75 : vector<64x128xf32>
    %77 = arith.truncf %76 : vector<64x128xf32> to vector<64x128xbf16>
    %c2 = arith.constant 2 : index
    %c0_29 = arith.constant 0 : index
    %c0_30 = arith.constant 0 : index
    %78 = vector.load %arg4[%c2, %c0_29, %c0_30] : memref<3x128x384xbf16, #tpu.memory_space<vmem>>, vector<1x128x384xbf16>
    %79 = vector.shape_cast %78 : vector<1x128x384xbf16> to vector<128x384xbf16>
    %cst_31 = arith.constant dense<0.000000e+00> : vector<64x384xf32>
    %80 = tpu.matmul %77, %79, %cst_31 {dimension_numbers = #tpu.dot_dimension_numbers<[1], [0], [0], [1], [0, 0, 1, 1], [], []>} : vector<64x128xbf16>, vector<128x384xbf16>, vector<64x384xf32> -> vector<64x384xf32>
    %81 = vector.extract_strided_slice %80 {offsets = [0, 128], sizes = [64, 128], strides = [1, 1]} : vector<64x384xf32> to vector<64x128xf32>
    %82 = vector.extract_strided_slice %80 {offsets = [0, 0], sizes = [64, 128], strides = [1, 1]} : vector<64x384xf32> to vector<64x128xf32>
    %c1_i32_32 = arith.constant 1 : i32
    %83 = tpu.dynamic_rotate %82 by %c1_i32_32 dim 0 : vector<64x128xf32>, i32 -> vector<64x128xf32>
    %cst_33 = arith.constant 0.000000e+00 : f32
    %84 = vector.shape_cast %11 : vector<64x1xi1> to vector<64x1xi1>
    %85 = vector.broadcast %84 : vector<64x1xi1> to vector<64x128xi1>
    %86 = vector.broadcast %cst_33 : f32 to vector<64x128xf32>
    %87 = arith.select %85, %86, %83 : vector<64x128xi1>, vector<64x128xf32>
    %88 = arith.addf %81, %87 : vector<64x128xf32>
    %89 = vector.extract_strided_slice %80 {offsets = [0, 256], sizes = [64, 128], strides = [1, 1]} : vector<64x384xf32> to vector<64x128xf32>
    %c63_i32_34 = arith.constant 63 : i32
    %90 = tpu.dynamic_rotate %89 by %c63_i32_34 dim 0 : vector<64x128xf32>, i32 -> vector<64x128xf32>
    %cst_35 = arith.constant 0.000000e+00 : f32
    %91 = vector.shape_cast %14 : vector<64x1xi1> to vector<64x1xi1>
    %92 = vector.broadcast %91 : vector<64x1xi1> to vector<64x128xi1>
    %93 = vector.broadcast %cst_35 : f32 to vector<64x128xf32>
    %94 = arith.select %92, %93, %90 : vector<64x128xi1>, vector<64x128xf32>
    %95 = arith.addf %88, %94 : vector<64x128xf32>
    %c2_36 = arith.constant 2 : index
    %c0_37 = arith.constant 0 : index
    %96 = vector.load %arg5[%c2_36, %c0_37] : memref<3x128xf32, #tpu.memory_space<vmem>>, vector<1x128xf32>
    %97 = vector.shape_cast %96 : vector<1x128xf32> to vector<128xf32>
    %98 = vector.shape_cast %97 : vector<128xf32> to vector<1x128xf32>
    %99 = vector.broadcast %98 : vector<1x128xf32> to vector<64x128xf32>
    %100 = arith.mulf %95, %99 : vector<64x128xf32>
    %c2_38 = arith.constant 2 : index
    %c0_39 = arith.constant 0 : index
    %101 = vector.load %arg6[%c2_38, %c0_39] : memref<3x128xf32, #tpu.memory_space<vmem>>, vector<1x128xf32>
    %102 = vector.shape_cast %101 : vector<1x128xf32> to vector<128xf32>
    %103 = vector.shape_cast %102 : vector<128xf32> to vector<1x128xf32>
    %104 = vector.broadcast %103 : vector<1x128xf32> to vector<64x128xf32>
    %105 = arith.addf %100, %104 : vector<64x128xf32>
    %cst_40 = arith.constant 0.000000e+00 : f32
    %106 = vector.broadcast %cst_40 : f32 to vector<64x128xf32>
    %107 = arith.maximumf %105, %106 : vector<64x128xf32>
    %108 = vector.shape_cast %107 : vector<64x128xf32> to vector<4x16x128xf32>
    %c0_41 = arith.constant 0 : index
    %c0_42 = arith.constant 0 : index
    %c0_43 = arith.constant 0 : index
    %109 = vector.load %arg7[%c0_41, %c0_42, %c0_43] : memref<4x16x128xf32, #tpu.memory_space<vmem>>, vector<4x16x128xf32>
    tpu.vector_store %arg7[%c0_41, %c0_42, %c0_43], %108 {strides = array<i32>} : memref<4x16x128xf32, #tpu.memory_space<vmem>>, vector<4x16x128xf32>,
    return
  }
  func.func @transform_0(%arg0: i32) -> (i32, i32, i32) {
    %c0_i32 = arith.constant 0 : i32
    %c0_i32_0 = arith.constant 0 : i32
    %c0_i32_1 = arith.constant 0 : i32
    return %arg0, %c0_i32, %c0_i32_0 : i32, i32, i32
  }
  func.func @transform_1(%arg0: i32) -> (i32, i32) {
    %c0_i32 = arith.constant 0 : i32
    %c0_i32_0 = arith.constant 0 : i32
    %c0_i32_1 = arith.constant 0 : i32
    return %c0_i32, %c0_i32_0 : i32, i32
  }
  func.func @transform_2(%arg0: i32) -> (i32, i32) {
    %c0_i32 = arith.constant 0 : i32
    %c0_i32_0 = arith.constant 0 : i32
    %c0_i32_1 = arith.constant 0 : i32
    return %c0_i32, %c0_i32_0 : i32, i32
  }
  func.func @transform_3(%arg0: i32) -> (i32, i32, i32) {
    %c0_i32 = arith.constant 0 : i32
    %c0_i32_0 = arith.constant 0 : i32
    %c0_i32_1 = arith.constant 0 : i32
    %c0_i32_2 = arith.constant 0 : i32
    return %c0_i32, %c0_i32_0, %c0_i32_1 : i32, i32, i32
  }
  func.func @transform_4(%arg0: i32) -> (i32, i32) {
    %c0_i32 = arith.constant 0 : i32
    %c0_i32_0 = arith.constant 0 : i32
    %c0_i32_1 = arith.constant 0 : i32
    return %c0_i32, %c0_i32_0 : i32, i32
  }
  func.func @transform_5(%arg0: i32) -> (i32, i32) {
    %c0_i32 = arith.constant 0 : i32
    %c0_i32_0 = arith.constant 0 : i32
    %c0_i32_1 = arith.constant 0 : i32
    return %c0_i32, %c0_i32_0 : i32, i32
  }
  func.func @transform_6(%arg0: i32) -> (i32, i32, i32) {
    %c0_i32 = arith.constant 0 : i32
    %c0_i32_0 = arith.constant 0 : i32
    %c0_i32_1 = arith.constant 0 : i32
    return %arg0, %c0_i32, %c0_i32_0 : i32, i32, i32
  }
}

module attributes {stable_mosaic.version = 11 : i64} {
  func.func @traj_tcn_kernel(%arg0: i32, %arg1: memref<4x16x4xf32, #tpu.memory_space<vmem>>, %arg2: memref<4x128xbf16, #tpu.memory_space<vmem>>, %arg3: memref<1x128xf32, #tpu.memory_space<vmem>>, %arg4: memref<3x128x384xbf16, #tpu.memory_space<vmem>>, %arg5: memref<3x128xf32, #tpu.memory_space<vmem>>, %arg6: memref<3x128xf32, #tpu.memory_space<vmem>>, %arg7: memref<4x16x128xf32, #tpu.memory_space<vmem>>) attributes {dimension_semantics = [#tpu.dimension_semantics<parallel>], iteration_bounds = array<i64: 1>, scalar_prefetch = 0 : i64, scratch_operands = 0 : i64, tpu.core_type = #tpu.core_type<tc>, window_params = [{transform_indices = @transform_0, window_bounds = array<i64: 4, 16, 4>}, {pipeline_mode = #tpu.pipeline_mode<synchronous>, transform_indices = @transform_1, window_bounds = array<i64: 4, 128>}, {pipeline_mode = #tpu.pipeline_mode<synchronous>, transform_indices = @transform_2, window_bounds = array<i64: 1, 128>}, {pipeline_mode = #tpu.pipeline_mode<synchronous>, transform_indices = @transform_3, window_bounds = array<i64: 3, 128, 384>}, {pipeline_mode = #tpu.pipeline_mode<synchronous>, transform_indices = @transform_4, window_bounds = array<i64: 3, 128>}, {pipeline_mode = #tpu.pipeline_mode<synchronous>, transform_indices = @transform_5, window_bounds = array<i64: 3, 128>}, {transform_indices = @transform_6, window_bounds = array<i64: 4, 16, 128>}]} {
    %c0 = arith.constant 0 : index
    %c0_0 = arith.constant 0 : index
    %c0_1 = arith.constant 0 : index
    %0 = vector.load %arg1[%c0, %c0_0, %c0_1] : memref<4x16x4xf32, #tpu.memory_space<vmem>>, vector<4x16x4xf32>
    %1 = vector.shape_cast %0 : vector<4x16x4xf32> to vector<64x4xf32>
    %2 = arith.truncf %1 : vector<64x4xf32> to vector<64x4xbf16>
    %c0_2 = arith.constant 0 : index
    %c0_3 = arith.constant 0 : index
    %3 = vector.load %arg2[%c0_2, %c0_3] : memref<4x128xbf16, #tpu.memory_space<vmem>>, vector<4x128xbf16>
    %cst = arith.constant dense<0.000000e+00> : vector<64x128xf32>
    %4 = tpu.matmul %2, %3, %cst {dimension_numbers = #tpu.dot_dimension_numbers<[1], [0], [0], [1], [0, 0, 1, 1], [], []>} : vector<64x4xbf16>, vector<4x128xbf16>, vector<64x128xf32> -> vector<64x128xf32>
    %c0_4 = arith.constant 0 : index
    %c0_5 = arith.constant 0 : index
    %5 = vector.load %arg3[%c0_4, %c0_5] : memref<1x128xf32, #tpu.memory_space<vmem>>, vector<1x128xf32>
    %6 = vector.broadcast %5 : vector<1x128xf32> to vector<64x128xf32>
    %7 = arith.addf %4, %6 : vector<64x128xf32>
    %8 = tpu.iota {dimensions = array<i32: 1>} : vector<4x16x1xi32>
    %c0_i32 = arith.constant 0 : i32
    %9 = vector.broadcast %c0_i32 : i32 to vector<4x16x1xi32>
    %10 = arith.cmpi eq, %8, %9 : vector<4x16x1xi32>
    %11 = vector.shape_cast %10 : vector<4x16x1xi1> to vector<64x1xi1>
    %c15_i32 = arith.constant 15 : i32
    %12 = vector.broadcast %c15_i32 : i32 to vector<4x16x1xi32>
    %13 = arith.cmpi eq, %8, %12 : vector<4x16x1xi32>
    %14 = vector.shape_cast %13 : vector<4x16x1xi1> to vector<64x1xi1>
    %15 = arith.truncf %7 : vector<64x128xf32> to vector<64x128xbf16>
    %c0_6 = arith.constant 0 : index
    %c0_7 = arith.constant 0 : index
    %c0_8 = arith.constant 0 : index
    %16 = vector.load %arg4[%c0_6, %c0_7, %c0_8] : memref<3x128x384xbf16, #tpu.memory_space<vmem>>, vector<1x128x384xbf16>
    %17 = vector.shape_cast %16 : vector<1x128x384xbf16> to vector<128x384xbf16>
    %cst_9 = arith.constant dense<0.000000e+00> : vector<64x384xf32>
    %18 = tpu.matmul %15, %17, %cst_9 {dimension_numbers = #tpu.dot_dimension_numbers<[1], [0], [0], [1], [0, 0, 1, 1], [], []>} : vector<64x128xbf16>, vector<128x384xbf16>, vector<64x384xf32> -> vector<64x384xf32>
    %19 = vector.extract_strided_slice %18 {offsets = [0, 128], sizes = [64, 128], strides = [1, 1]} : vector<64x384xf32> to vector<64x128xf32>
    %20 = vector.extract_strided_slice %18 {offsets = [0, 0], sizes = [64, 128], strides = [1, 1]} : vector<64x384xf32> to vector<64x128xf32>
    %c1_i32 = arith.constant 1 : i32
    %21 = tpu.dynamic_rotate %20 by %c1_i32 dim 0 : vector<64x128xf32>, i32 -> vector<64x128xf32>
    %cst_10 = arith.constant 0.000000e+00 : f32
    %22 = vector.shape_cast %11 : vector<64x1xi1> to vector<64x1xi1>
    %23 = vector.broadcast %22 : vector<64x1xi1> to vector<64x128xi1>
    %24 = vector.broadcast %cst_10 : f32 to vector<64x128xf32>
    %25 = arith.select %23, %24, %21 : vector<64x128xi1>, vector<64x128xf32>
    %26 = arith.addf %19, %25 : vector<64x128xf32>
    %27 = vector.extract_strided_slice %18 {offsets = [0, 256], sizes = [64, 128], strides = [1, 1]} : vector<64x384xf32> to vector<64x128xf32>
    %c63_i32 = arith.constant 63 : i32
    %28 = tpu.dynamic_rotate %27 by %c63_i32 dim 0 : vector<64x128xf32>, i32 -> vector<64x128xf32>
    %cst_11 = arith.constant 0.000000e+00 : f32
    %29 = vector.shape_cast %14 : vector<64x1xi1> to vector<64x1xi1>
    %30 = vector.broadcast %29 : vector<64x1xi1> to vector<64x128xi1>
    %31 = vector.broadcast %cst_11 : f32 to vector<64x128xf32>
    %32 = arith.select %30, %31, %28 : vector<64x128xi1>, vector<64x128xf32>
    %33 = arith.addf %26, %32 : vector<64x128xf32>
    %c0_12 = arith.constant 0 : index
    %c0_13 = arith.constant 0 : index
    %34 = vector.load %arg5[%c0_12, %c0_13] : memref<3x128xf32, #tpu.memory_space<vmem>>, vector<1x128xf32>
    %35 = vector.shape_cast %34 : vector<1x128xf32> to vector<128xf32>
    %36 = vector.shape_cast %35 : vector<128xf32> to vector<1x128xf32>
    %37 = vector.broadcast %36 : vector<1x128xf32> to vector<64x128xf32>
    %38 = arith.mulf %33, %37 : vector<64x128xf32>
    %c0_14 = arith.constant 0 : index
    %c0_15 = arith.constant 0 : index
    %39 = vector.load %arg6[%c0_14, %c0_15] : memref<3x128xf32, #tpu.memory_space<vmem>>, vector<1x128xf32>
    %40 = vector.shape_cast %39 : vector<1x128xf32> to vector<128xf32>
    %41 = vector.shape_cast %40 : vector<128xf32> to vector<1x128xf32>
    %42 = vector.broadcast %41 : vector<1x128xf32> to vector<64x128xf32>
    %43 = arith.addf %38, %42 : vector<64x128xf32>
    %cst_16 = arith.constant 0.000000e+00 : f32
    %44 = vector.broadcast %cst_16 : f32 to vector<64x128xf32>
    %45 = arith.maximumf %43, %44 : vector<64x128xf32>
    %46 = arith.truncf %45 : vector<64x128xf32> to vector<64x128xbf16>
    %c1 = arith.constant 1 : index
    %c0_17 = arith.constant 0 : index
    %c0_18 = arith.constant 0 : index
    %47 = vector.load %arg4[%c1, %c0_17, %c0_18] : memref<3x128x384xbf16, #tpu.memory_space<vmem>>, vector<1x128x384xbf16>
    %48 = vector.shape_cast %47 : vector<1x128x384xbf16> to vector<128x384xbf16>
    %cst_19 = arith.constant dense<0.000000e+00> : vector<64x384xf32>
    %49 = tpu.matmul %46, %48, %cst_19 {dimension_numbers = #tpu.dot_dimension_numbers<[1], [0], [0], [1], [0, 0, 1, 1], [], []>} : vector<64x128xbf16>, vector<128x384xbf16>, vector<64x384xf32> -> vector<64x384xf32>
    %50 = vector.extract_strided_slice %49 {offsets = [0, 128], sizes = [64, 128], strides = [1, 1]} : vector<64x384xf32> to vector<64x128xf32>
    %51 = vector.extract_strided_slice %49 {offsets = [0, 0], sizes = [64, 128], strides = [1, 1]} : vector<64x384xf32> to vector<64x128xf32>
    %c1_i32_20 = arith.constant 1 : i32
    %52 = tpu.dynamic_rotate %51 by %c1_i32_20 dim 0 : vector<64x128xf32>, i32 -> vector<64x128xf32>
    %cst_21 = arith.constant 0.000000e+00 : f32
    %53 = vector.shape_cast %11 : vector<64x1xi1> to vector<64x1xi1>
    %54 = vector.broadcast %53 : vector<64x1xi1> to vector<64x128xi1>
    %55 = vector.broadcast %cst_21 : f32 to vector<64x128xf32>
    %56 = arith.select %54, %55, %52 : vector<64x128xi1>, vector<64x128xf32>
    %57 = arith.addf %50, %56 : vector<64x128xf32>
    %58 = vector.extract_strided_slice %49 {offsets = [0, 256], sizes = [64, 128], strides = [1, 1]} : vector<64x384xf32> to vector<64x128xf32>
    %c63_i32_22 = arith.constant 63 : i32
    %59 = tpu.dynamic_rotate %58 by %c63_i32_22 dim 0 : vector<64x128xf32>, i32 -> vector<64x128xf32>
    %cst_23 = arith.constant 0.000000e+00 : f32
    %60 = vector.shape_cast %14 : vector<64x1xi1> to vector<64x1xi1>
    %61 = vector.broadcast %60 : vector<64x1xi1> to vector<64x128xi1>
    %62 = vector.broadcast %cst_23 : f32 to vector<64x128xf32>
    %63 = arith.select %61, %62, %59 : vector<64x128xi1>, vector<64x128xf32>
    %64 = arith.addf %57, %63 : vector<64x128xf32>
    %c1_24 = arith.constant 1 : index
    %c0_25 = arith.constant 0 : index
    %65 = vector.load %arg5[%c1_24, %c0_25] : memref<3x128xf32, #tpu.memory_space<vmem>>, vector<1x128xf32>
    %66 = vector.shape_cast %65 : vector<1x128xf32> to vector<128xf32>
    %67 = vector.shape_cast %66 : vector<128xf32> to vector<1x128xf32>
    %68 = vector.broadcast %67 : vector<1x128xf32> to vector<64x128xf32>
    %69 = arith.mulf %64, %68 : vector<64x128xf32>
    %c1_26 = arith.constant 1 : index
    %c0_27 = arith.constant 0 : index
    %70 = vector.load %arg6[%c1_26, %c0_27] : memref<3x128xf32, #tpu.memory_space<vmem>>, vector<1x128xf32>
    %71 = vector.shape_cast %70 : vector<1x128xf32> to vector<128xf32>
    %72 = vector.shape_cast %71 : vector<128xf32> to vector<1x128xf32>
    %73 = vector.broadcast %72 : vector<1x128xf32> to vector<64x128xf32>
    %74 = arith.addf %69, %73 : vector<64x128xf32>
    %cst_28 = arith.constant 0.000000e+00 : f32
    %75 = vector.broadcast %cst_28 : f32 to vector<64x128xf32>
    %76 = arith.maximumf %74, %75 : vector<64x128xf32>
    %77 = arith.truncf %76 : vector<64x128xf32> to vector<64x128xbf16>
    %c2 = arith.constant 2 : index
    %c0_29 = arith.constant 0 : index
    %c0_30 = arith.constant 0 : index
    %78 = vector.load %arg4[%c2, %c0_29, %c0_30] : memref<3x128x384xbf16, #tpu.memory_space<vmem>>, vector<1x128x384xbf16>
    %79 = vector.shape_cast %78 : vector<1x128x384xbf16> to vector<128x384xbf16>
    %cst_31 = arith.constant dense<0.000000e+00> : vector<64x384xf32>
    %80 = tpu.matmul %77, %79, %cst_31 {dimension_numbers = #tpu.dot_dimension_numbers<[1], [0], [0], [1], [0, 0, 1, 1], [], []>} : vector<64x128xbf16>, vector<128x384xbf16>, vector<64x384xf32> -> vector<64x384xf32>
    %81 = vector.extract_strided_slice %80 {offsets = [0, 128], sizes = [64, 128], strides = [1, 1]} : vector<64x384xf32> to vector<64x128xf32>
    %82 = vector.extract_strided_slice %80 {offsets = [0, 0], sizes = [64, 128], strides = [1, 1]} : vector<64x384xf32> to vector<64x128xf32>
    %c1_i32_32 = arith.constant 1 : i32
    %83 = tpu.dynamic_rotate %82 by %c1_i32_32 dim 0 : vector<64x128xf32>, i32 -> vector<64x128xf32>
    %cst_33 = arith.constant 0.000000e+00 : f32
    %84 = vector.shape_cast %11 : vector<64x1xi1> to vector<64x1xi1>
    %85 = vector.broadcast %84 : vector<64x1xi1> to vector<64x128xi1>
    %86 = vector.broadcast %cst_33 : f32 to vector<64x128xf32>
    %87 = arith.select %85, %86, %83 : vector<64x128xi1>, vector<64x128xf32>
    %88 = arith.addf %81, %87 : vector<64x128xf32>
    %89 = vector.extract_strided_slice %80 {offsets = [0, 256], sizes = [64, 128], strides = [1, 1]} : vector<64x384xf32> to vector<64x128xf32>
    %c63_i32_34 = arith.constant 63 : i32
    %90 = tpu.dynamic_rotate %89 by %c63_i32_34 dim 0 : vector<64x128xf32>, i32 -> vector<64x128xf32>
    %cst_35 = arith.constant 0.000000e+00 : f32
    %91 = vector.shape_cast %14 : vector<64x1xi1> to vector<64x1xi1>
    %92 = vector.broadcast %91 : vector<64x1xi1> to vector<64x128xi1>
    %93 = vector.broadcast %cst_35 : f32 to vector<64x128xf32>
    %94 = arith.select %92, %93, %90 : vector<64x128xi1>, vector<64x128xf32>
    %95 = arith.addf %88, %94 : vector<64x128xf32>
    %c2_36 = arith.constant 2 : index
    %c0_37 = arith.constant 0 : index
    %96 = vector.load %arg5[%c2_36, %c0_37] : memref<3x128xf32, #tpu.memory_space<vmem>>, vector<1x128xf32>
    %97 = vector.shape_cast %96 : vector<1x128xf32> to vector<128xf32>
    %98 = vector.shape_cast %97 : vector<128xf32> to vector<1x128xf32>
    %99 = vector.broadcast %98 : vector<1x128xf32> to vector<64x128xf32>
    %100 = arith.mulf %95, %99 : vector<64x128xf32>
    %c2_38 = arith.constant 2 : index
    %c0_39 = arith.constant 0 : index
    %101 = vector.load %arg6[%c2_38, %c0_39] : memref<3x128xf32, #tpu.memory_space<vmem>>, vector<1x128xf32>
    %102 = vector.shape_cast %101 : vector<1x128xf32> to vector<128xf32>
    %103 = vector.shape_cast %102 : vector<128xf32> to vector<1x128xf32>
    %104 = vector.broadcast %103 : vector<1x128xf32> to vector<64x128xf32>
    %105 = arith.addf %100, %104 : vector<64x128xf32>
    %cst_40 = arith.constant 0.000000e+00 : f32
    %106 = vector.broadcast %cst_40 : f32 to vector<64x128xf32>
    %107 = arith.maximumf %105, %106 : vector<64x128xf32>
    %108 = vector.shape_cast %107 : vector<64x128xf32> to vector<4x16x128xf32>
    %c0_41 = arith.constant 0 : index
    %c0_42 = arith.constant 0 : index
    %c0_43 = arith.constant 0 : index
    %109 = vector.load %arg7[%c0_41, %c0_42, %c0_43] : memref<4x16x128xf32, #tpu.memory_space<vmem>>, vector<4x16x128xf32>
    tpu.vector_store %arg7[%c0_41, %c0_42, %c0_43], %108 {strides = array<i32>} : memref<4x16x128xf32, #tpu.memory_space<vmem>>, vector<4x16x128xf32>,
    return
  }
  func.func @transform_0(%arg0: i32) -> (i32, i32, i32) {
    %c0_i32 = arith.constant 0 : i32
    %c0_i32_0 = arith.constant 0 : i32
    %c0_i32_1 = arith.constant 0 : i32
    return %arg0, %c0_i32, %c0_i32_0 : i32, i32, i32
  }
  func.func @transform_1(%arg0: i32) -> (i32, i32) {
    %c0_i32 = arith.constant 0 : i32
    %c0_i32_0 = arith.constant 0 : i32
    %c0_i32_1 = arith.constant 0 : i32
    return %c0_i32, %c0_i32_0 : i32, i32
  }
  func.func @transform_2(%arg0: i32) -> (i32, i32) {
    %c0_i32 = arith.constant 0 : i32
    %c0_i32_0 = arith.constant 0 : i32
    %c0_i32_1 = arith.constant 0 : i32
    return %c0_i32, %c0_i32_0 : i32, i32
  }
  func.func @transform_3(%arg0: i32) -> (i32, i32, i32) {
    %c0_i32 = arith.constant 0 : i32
    %c0_i32_0 = arith.constant 0 : i32
    %c0_i32_1 = arith.constant 0 : i32
    %c0_i32_2 = arith.constant 0 : i32
    return %c0_i32, %c0_i32_0, %c0_i32_1 : i32, i32, i32
  }
  func.func @transform_4(%arg0: i32) -> (i32, i32) {
    %c0_i32 = arith.constant 0 : i32
    %c0_i32_0 = arith.constant 0 : i32
    %c0_i32_1 = arith.constant 0 : i32
    return %c0_i32, %c0_i32_0 : i32, i32
  }
  func.func @transform_5(%arg0: i32) -> (i32, i32) {
    %c0_i32 = arith.constant 0 : i32
    %c0_i32_0 = arith.constant 0 : i32
    %c0_i32_1 = arith.constant 0 : i32
    return %c0_i32, %c0_i32_0 : i32, i32
  }
  func.func @transform_6(%arg0: i32) -> (i32, i32, i32) {
    %c0_i32 = arith.constant 0 : i32
    %c0_i32_0 = arith.constant 0 : i32
    %c0_i32_1 = arith.constant 0 : i32
    return %arg0, %c0_i32, %c0_i32_0 : i32, i32, i32
  }
}

</mosaic_0001>

<llo_original>
// kernel: tpu_custom_call.1
$region0: #{tpu_custom_call.1}
  #allocation0 [shape = 'u32[]', space=smem, size = 0x4, offset = 0x4, fixed_abs, tag = 'smem constant byte address 0x4 - core index']
  #allocation1 [shape = 'u32[144,128]{1,0:T(1,128)}', space=vmem, size = 0x12000, scoped, tag = 'internal scratch']
  %s0 = inlined_call_operand.vmem [shape: f32[4,16,4], index: 0, kind: input, shape index: {}]
  %s1 = inlined_call_operand.vmem [shape: bf16[4,128], index: 1, kind: input, shape index: {}]
  %s2 = inlined_call_operand.vmem [shape: f32[1,128], index: 2, kind: input, shape index: {}]
  %s3 = inlined_call_operand.hbm [shape: bf16[3,128,384], index: 3, kind: input, shape index: {}]
  %s4 = inlined_call_operand.vmem [shape: f32[3,128], index: 4, kind: input, shape index: {}]
  %s5 = inlined_call_operand.vmem [shape: f32[3,128], index: 5, kind: input, shape index: {}]
  %s6 = inlined_call_operand.hbm [shape: f32[4,16,128], index: 6, kind: output, shape index: {}]
  %s7 = sld [smem:[#allocation0]]
  $region38: #{tpu_custom_call.1} parent=0
    _
  %s9 = ssub.s32 1, %s7
  %s10 = scalar_select 0, %s9, %s7
  $region1: #{tpu_custom_call.1} parent=0
    #allocation2 [shape = 'u8[294912]{0}', space=vmem, size = 0x48000, scoped, tag = 'input window, operand 3, single buffered']
    #allocation3 [shape = 's32[1]{0}', space=sflag, size = 0x4, scoped, tag = 'scoped memory for tpu_custom_call.1']
    #allocation4 [shape = 's32[1]{0}', space=sflag, size = 0x4, scoped, tag = 'scoped memory for tpu_custom_call.1']
    #allocation5 [shape = 'u8[32768]{0}', space=vmem, size = 0x8000, scoped, tag = 'output window, operand 0, single buffered']
    %11 = vsyncpa [#allocation3], 0
    %12 = vsyncpa [#allocation4], 0
    // Predicated region
    $region2: #{tpu_custom_call.1} parent=1 // pred_check
      _
    $region3: #{tpu_custom_call.1} parent=1 // pred_check_branch
      %14 = sbr.rel (0) target = $region5
    $region4: #{tpu_custom_call.1} parent=1 // pred_region
      _
    $region5: #{tpu_custom_call.1} parent=1 // pred_fallthru
      _
    // Predicated region
    $region6: #{tpu_custom_call.1} parent=1 // pred_check
      _
    $region7: #{tpu_custom_call.1} parent=1 // pred_check_branch
      %16 = sbr.rel (0) target = $region9
    $region8: #{tpu_custom_call.1} parent=1 // pred_region
      _
    $region9: #{tpu_custom_call.1} parent=1 // pred_fallthru
      _
    // Predicated region
    $region10: #{tpu_custom_call.1} parent=1 // pred_check
      _
    $region11: #{tpu_custom_call.1} parent=1 // pred_check_branch
      %18 = sbr.rel (0) target = $region13
    $region12: #{tpu_custom_call.1} parent=1 // pred_region
      _
    $region13: #{tpu_custom_call.1} parent=1 // pred_fallthru
      _
    // Predicated region
    $region14: #{tpu_custom_call.1} parent=1 // pred_check
      _
    $region15: #{tpu_custom_call.1} parent=1 // pred_check_branch
      %20 = sbr.rel (0) target = $region17
    $region16: #{tpu_custom_call.1} parent=1 // pred_region
      %s22 = ssub.s32 9216, 9216
      %23 = vsyncadd [#allocation3], %s22
      %s24 = sshll.u32 [#allocation2], 4
      %s25 = int_to_ptr.vmem [resolvable:$true] %s24
      %30 = dma.hbm_to_vmem [thread:$0]  %s3, 9216, %s25, [#allocation3], 192, 192, 12
    $region17: #{tpu_custom_call.1} parent=1 // pred_fallthru
      _
    // Predicated region
    $region18: #{tpu_custom_call.1} parent=1 // pred_check
      _
    $region19: #{tpu_custom_call.1} parent=1 // pred_check_branch
      %32 = sbr.rel (0) target = $region21
    $region20: #{tpu_custom_call.1} parent=1 // pred_region
      _
    $region21: #{tpu_custom_call.1} parent=1 // pred_fallthru
      _
    // Predicated region
    $region22: #{tpu_custom_call.1} parent=1 // pred_check
      _
    $region23: #{tpu_custom_call.1} parent=1 // pred_check_branch
      %34 = sbr.rel (0) target = $region25
    $region24: #{tpu_custom_call.1} parent=1 // pred_region
      _
    $region25: #{tpu_custom_call.1} parent=1 // pred_fallthru
      _
    // Predicated region
    $region26: #{tpu_custom_call.1} parent=1 // pred_check
      _
    $region27: #{tpu_custom_call.1} parent=1 // pred_check_branch
      %36 = sbr.rel (0) target = $region29
    $region28: #{tpu_custom_call.1} parent=1 // pred_region
      %37 = dma.done [#allocation3], 9216
    $region29: #{tpu_custom_call.1} parent=1 // pred_fallthru
      _
    %v39 = vld [vmem:[%s0] sm:$0xff]
    %v40 = vld [vmem:[%s0 + $0x8] sm:$0xff]
    %v41 = vld [vmem:[%s0 + $0x10] sm:$0xff]
    %v42 = vld [vmem:[%s0 + $0x18] sm:$0xff]
    %v43 = vld [vmem:[%s0 + $0x20] sm:$0xff]
    %v44 = vld [vmem:[%s0 + $0x28] sm:$0xff]
    %v45 = vld [vmem:[%s0 + $0x30] sm:$0xff]
    %v46 = vld [vmem:[%s0 + $0x38] sm:$0xff]
    %v47 = vpack.c.bf16 %v40, %v39
    %v48 = vpack.c.bf16 %v42, %v41
    %v49 = vpack.c.bf16 %v44, %v43
    %v50 = vpack.c.bf16 %v46, %v45
    %v51 = vld [vmem:[%s1] sm:$0x3]
    %v52 = vld [vmem:[%s2] sm:$0x1]
    %v54 = vlaneseq
    %v55 = vshrl.u32 %v54, 7
    %v56 = vsub.s32 0, %v55
    %v57 = vrot.slane %v52, %v56
    %vm59 = vcmask 31744
    %v61 = vsel %vm59, %v47, 0
    %v64 = vsel %vm59, %v48, 0
    %v67 = vsel %vm59, %v49, 0
    %v70 = vsel %vm59, %v50, 0
    %vm72 = vcmask 1041408
    %v74 = vsel %vm72, %v51, 0
    %76 = vmatprep.subr.bf16.mxu0 0
    %77 = vmatpush1.bf16.msra.mxu0 %v74
    %78 = vmatprep.subr.bf16.mxu0 0
    %79 = vmatpush1.bf16.msra.mxu0 0
    %80 = vmatprep.subr.bf16.mxu0 0
    %81 = vmatpush1.bf16.msra.mxu0 0
    %82 = vmatprep.subr.bf16.mxu0 0
    %83 = vmatpush1.bf16.msra.mxu0 0
    %84 = vmatprep.subr.bf16.mxu0 0
    %85 = vmatpush1.bf16.msra.mxu0 0
    %86 = vmatprep.subr.bf16.mxu0 0
    %87 = vmatpush1.bf16.msra.mxu0 0
    %88 = vmatprep.subr.bf16.mxu0 0
    %89 = vmatpush1.bf16.msra.mxu0 0
    %90 = vmatprep.subr.bf16.mxu0 0
    %91 = vmatpush1.bf16.msra.mxu0 0
    %92 = vmatprep.subr.bf16.mxu0 0
    %93 = vmatpush1.bf16.msra.mxu0 0
    %94 = vmatprep.subr.bf16.mxu0 0
    %95 = vmatpush1.bf16.msra.mxu0 0
    %96 = vmatprep.subr.bf16.mxu0 0
    %97 = vmatpush1.bf16.msra.mxu0 0
    %98 = vmatprep.subr.bf16.mxu0 0
    %99 = vmatpush1.bf16.msra.mxu0 0
    %100 = vmatprep.subr.bf16.mxu0 0
    %101 = vmatpush1.bf16.msra.mxu0 0
    %102 = vmatprep.subr.bf16.mxu0 0
    %103 = vmatpush1.bf16.msra.mxu0 0
    %104 = vmatprep.subr.bf16.mxu0 0
    %105 = vmatpush1.bf16.msra.mxu0 0
    %106 = vmatprep.subr.bf16.mxu0 0
    %107 = vmatpush1.bf16.msra.mxu0 0
    %108 = vmatprep.mubr.bf16.mxu0 0
    %109 = vmatmul.mubr.bf16.gmra.mrb[0].mxu0 %v61
    %v110 = vpop.f32.mrb[0].mxu0
    %v111 = vadd.f32 %v57, %v110
    %v112 = vpop.f32.mrb[0].mxu0
    %v113 = vpop.f32.mrb[0].mxu0
    %v114 = vadd.f32 %v57, %v113
    %v115 = vpop.f32.mrb[0].mxu0
    %116 = vmatprep.mubr.bf16.mxu0 0
    %117 = vmatmul.mubr.bf16.gmra.mrb[0].mxu0 %v64
    %v118 = vpop.f32.mrb[0].mxu0
    %v119 = vadd.f32 %v57, %v118
    %v120 = vpop.f32.mrb[0].mxu0
    %v121 = vpop.f32.mrb[0].mxu0
    %v122 = vadd.f32 %v57, %v121
    %v123 = vpop.f32.mrb[0].mxu0
    %124 = vmatprep.mubr.bf16.mxu0 0
    %125 = vmatmul.mubr.bf16.gmra.mrb[0].mxu0 %v67
    %v126 = vpop.f32.mrb[0].mxu0
    %v127 = vadd.f32 %v57, %v126
    %v128 = vpop.f32.mrb[0].mxu0
    %v129 = vpop.f32.mrb[0].mxu0
    %v130 = vadd.f32 %v57, %v129
    %v131 = vpop.f32.mrb[0].mxu0
    %132 = vmatprep.mubr.bf16.mxu0 0
    %133 = vmatmul.mubr.bf16.gmra.mrb[0].mxu0 %v70
    %v134 = vpop.f32.mrb[0].mxu0
    %v135 = vadd.f32 %v57, %v134
    %v136 = vpop.f32.mrb[0].mxu0
    %v137 = vpop.f32.mrb[0].mxu0
    %v138 = vadd.f32 %v57, %v137
    %v139 = vpop.f32.mrb[0].mxu0
    %140 = vdwg.mxu0
    %v141 = vlaneseq
    %v142 = vshrl.u32 %v141, 7
    %v143 = vadd.s32 %v142, 8
    %vm144 = vcmp.eq.s32.totalorder %v142, 0
    %vm145 = vcmp.eq.s32.totalorder %v143, 0
    %vm146 = vcmp.eq.s32.totalorder %v142, 15
    %vm147 = vcmp.eq.s32.totalorder %v143, 15
    %v148 = vpack.c.bf16 %v114, %v111
    %v149 = vpack.c.bf16 %v122, %v119
    %v150 = vpack.c.bf16 %v130, %v127
    %v151 = vpack.c.bf16 %v138, %v135
    %v152 = vld [vmem:[#allocation2] sm:$0xff]
    %v153 = vld [vmem:[#allocation2 + $0x8] sm:$0xf]
    %v154 = vld [vmem:[#allocation2 + $0xc] sm:$0xff]
    %v155 = vld [vmem:[#allocation2 + $0x14] sm:$0xf]
    %v156 = vld [vmem:[#allocation2 + $0x18] sm:$0xff]
    %v157 = vld [vmem:[#allocation2 + $0x20] sm:$0xf]
    %v158 = vld [vmem:[#allocation2 + $0x24] sm:$0xff]
    %v159 = vld [vmem:[#allocation2 + $0x2c] sm:$0xf]
    %v160 = vld [vmem:[#allocation2 + $0x30] sm:$0xff]
    %v161 = vld [vmem:[#allocation2 + $0x38] sm:$0xf]
    %v162 = vld [vmem:[#allocation2 + $0x3c] sm:$0xff]
    %v163 = vld [vmem:[#allocation2 + $0x44] sm:$0xf]
    %v164 = vld [vmem:[#allocation2 + $0x48] sm:$0xff]
    %v165 = vld [vmem:[#allocation2 + $0x50] sm:$0xf]
    %v166 = vld [vmem:[#allocation2 + $0x54] sm:$0xff]
    %v167 = vld [vmem:[#allocation2 + $0x5c] sm:$0xf]
    %v168 = vld [vmem:[#allocation2 + $0x60] sm:$0xff]
    %v169 = vld [vmem:[#allocation2 + $0x68] sm:$0xf]
    %v170 = vld [vmem:[#allocation2 + $0x6c] sm:$0xff]
    %v171 = vld [vmem:[#allocation2 + $0x74] sm:$0xf]
    %v172 = vld [vmem:[#allocation2 + $0x78] sm:$0xff]
    %v173 = vld [vmem:[#allocation2 + $0x80] sm:$0xf]
    %v174 = vld [vmem:[#allocation2 + $0x84] sm:$0xff]
    %v175 = vld [vmem:[#allocation2 + $0x8c] sm:$0xf]
    %v176 = vld [vmem:[#allocation2 + $0x90] sm:$0xff]
    %v177 = vld [vmem:[#allocation2 + $0x98] sm:$0xf]
    %v178 = vld [vmem:[#allocation2 + $0x9c] sm:$0xff]
    %v179 = vld [vmem:[#allocation2 + $0xa4] sm:$0xf]
    %v180 = vld [vmem:[#allocation2 + $0xa8] sm:$0xff]
    %v181 = vld [vmem:[#allocation2 + $0xb0] sm:$0xf]
    %v182 = vld [vmem:[#allocation2 + $0xb4] sm:$0xff]
    %v183 = vld [vmem:[#allocation2 + $0xbc] sm:$0xf]
    %v216 = vunpack.c.l.b16 %v152
    %v217 = vunpack.c.h.b16 %v152
    %v218 = vunpack.c.l.b16 %v153
    %v219 = vunpack.c.l.b16 %v154
    %v220 = vunpack.c.h.b16 %v154
    %v221 = vunpack.c.l.b16 %v155
    %v222 = vunpack.c.l.b16 %v156
    %v223 = vunpack.c.h.b16 %v156
    %v224 = vunpack.c.l.b16 %v157
    %v225 = vunpack.c.l.b16 %v158
    %v226 = vunpack.c.h.b16 %v158
    %v227 = vunpack.c.l.b16 %v159
    %v228 = vunpack.c.l.b16 %v160
    %v229 = vunpack.c.h.b16 %v160
    %v230 = vunpack.c.l.b16 %v161
    %v231 = vunpack.c.l.b16 %v162
    %v232 = vunpack.c.h.b16 %v162
    %v233 = vunpack.c.l.b16 %v163
    %v234 = vunpack.c.l.b16 %v164
    %v235 = vunpack.c.h.b16 %v164
    %v236 = vunpack.c.l.b16 %v165
    %v237 = vunpack.c.l.b16 %v166
    %v238 = vunpack.c.h.b16 %v166
    %v239 = vunpack.c.l.b16 %v167
    %v240 = vunpack.c.l.b16 %v168
    %v241 = vunpack.c.h.b16 %v168
    %v242 = vunpack.c.l.b16 %v169
    %v243 = vunpack.c.l.b16 %v170
    %v244 = vunpack.c.h.b16 %v170
    %v245 = vunpack.c.l.b16 %v171
    %v246 = vunpack.c.l.b16 %v172
    %v247 = vunpack.c.h.b16 %v172
    %v248 = vunpack.c.l.b16 %v173
    %v249 = vunpack.c.l.b16 %v174
    %v250 = vunpack.c.h.b16 %v174
    %v251 = vunpack.c.l.b16 %v175
    %v252 = vunpack.c.l.b16 %v176
    %v253 = vunpack.c.h.b16 %v176
    %v254 = vunpack.c.l.b16 %v177
    %v255 = vunpack.c.l.b16 %v178
    %v256 = vunpack.c.h.b16 %v178
    %v257 = vunpack.c.l.b16 %v179
    %v258 = vunpack.c.l.b16 %v180
    %v259 = vunpack.c.h.b16 %v180
    %v260 = vunpack.c.l.b16 %v181
    %v261 = vunpack.c.l.b16 %v182
    %v262 = vunpack.c.h.b16 %v182
    %v263 = vunpack.c.l.b16 %v183
    %v264 = vpack.c.b16 %v219, %v216
    %v265 = vpack.c.b16 %v220, %v217
    %v266 = vpack.c.b16 %v221, %v218
    %v267 = vpack.c.b16 %v225, %v222
    %v268 = vpack.c.b16 %v226, %v223
    %v269 = vpack.c.b16 %v227, %v224
    %v270 = vpack.c.b16 %v231, %v228
    %v271 = vpack.c.b16 %v232, %v229
    %v272 = vpack.c.b16 %v233, %v230
    %v273 = vpack.c.b16 %v237, %v234
    %v274 = vpack.c.b16 %v238, %v235
    %v275 = vpack.c.b16 %v239, %v236
    %v276 = vpack.c.b16 %v243, %v240
    %v277 = vpack.c.b16 %v244, %v241
    %v278 = vpack.c.b16 %v245, %v242
    %v279 = vpack.c.b16 %v249, %v246
    %v280 = vpack.c.b16 %v250, %v247
    %v281 = vpack.c.b16 %v251, %v248
    %v282 = vpack.c.b16 %v255, %v252
    %v283 = vpack.c.b16 %v256, %v253
    %v284 = vpack.c.b16 %v257, %v254
    %v285 = vpack.c.b16 %v261, %v258
    %v286 = vpack.c.b16 %v262, %v259
    %v287 = vpack.c.b16 %v263, %v260
    %312 = vmatprep.subr.bf16.mxu0 %v265
    %313 = vmatpush1.bf16.msra.mxu0 %v264
    %314 = vmatprep.subr.bf16.mxu0 %v268
    %315 = vmatpush1.bf16.msra.mxu0 %v267
    %316 = vmatprep.subr.bf16.mxu0 %v271
    %317 = vmatpush1.bf16.msra.mxu0 %v270
    %318 = vmatprep.subr.bf16.mxu0 %v274
    %319 = vmatpush1.bf16.msra.mxu0 %v273
    %320 = vmatprep.subr.bf16.mxu0 %v277
    %321 = vmatpush1.bf16.msra.mxu0 %v276
    %322 = vmatprep.subr.bf16.mxu0 %v280
    %323 = vmatpush1.bf16.msra.mxu0 %v279
    %324 = vmatprep.subr.bf16.mxu0 %v283
    %325 = vmatpush1.bf16.msra.mxu0 %v282
    %326 = vmatprep.subr.bf16.mxu0 %v286
    %327 = vmatpush1.bf16.msra.mxu0 %v285
    %328 = vmatprep.subr.bf16.mxu0 0
    %329 = vmatpush1.bf16.msra.mxu0 0
    %330 = vmatprep.subr.bf16.mxu0 0
    %331 = vmatpush1.bf16.msra.mxu0 0
    %332 = vmatprep.subr.bf16.mxu0 0
    %333 = vmatpush1.bf16.msra.mxu0 0
    %334 = vmatprep.subr.bf16.mxu0 0
    %335 = vmatpush1.bf16.msra.mxu0 0
    %336 = vmatprep.subr.bf16.mxu0 0
    %337 = vmatpush1.bf16.msra.mxu0 0
    %338 = vmatprep.subr.bf16.mxu0 0
    %339 = vmatpush1.bf16.msra.mxu0 0
    %340 = vmatprep.subr.bf16.mxu0 0
    %341 = vmatpush1.bf16.msra.mxu0 0
    %342 = vmatprep.subr.bf16.mxu0 0
    %343 = vmatpush1.bf16.msra.mxu0 0
    %344 = vmatprep.mubr.bf16.mxu0 0
    %345 = vmatmul.mubr.bf16.gmra.mrb[0].mxu0 %v148
    %v346 = vpop.f32.mrb[0].mxu0
    %v347 = vadd.f32 0.0, %v346
    %v348 = vpop.f32.mrb[0].mxu0
    %v349 = vadd.f32 0.0, %v348
    %v350 = vpop.f32.mrb[0].mxu0
    %v351 = vadd.f32 0.0, %v350
    %v352 = vpop.f32.mrb[0].mxu0
    %v353 = vadd.f32 0.0, %v352
    %354 = vmatprep.mubr.bf16.mxu0 0
    %355 = vmatmul.mubr.bf16.gmra.mrb[0].mxu0 %v149
    %v356 = vpop.f32.mrb[0].mxu0
    %v357 = vadd.f32 0.0, %v356
    %v358 = vpop.f32.mrb[0].mxu0
    %v359 = vadd.f32 0.0, %v358
    %v360 = vpop.f32.mrb[0].mxu0
    %v361 = vadd.f32 0.0, %v360
    %v362 = vpop.f32.mrb[0].mxu0
    %v363 = vadd.f32 0.0, %v362
    %364 = vmatprep.mubr.bf16.mxu0 0
    %365 = vmatmul.mubr.bf16.gmra.mrb[0].mxu0 %v150
    %v366 = vpop.f32.mrb[0].mxu0
    %v367 = vadd.f32 0.0, %v366
    %v368 = vpop.f32.mrb[0].mxu0
    %v369 = vadd.f32 0.0, %v368
    %v370 = vpop.f32.mrb[0].mxu0
    %v371 = vadd.f32 0.0, %v370
    %v372 = vpop.f32.mrb[0].mxu0
    %v373 = vadd.f32 0.0, %v372
    %374 = vmatprep.mubr.bf16.mxu0 0
    %375 = vmatmul.mubr.bf16.gmra.mrb[0].mxu0 %v151
    %v376 = vpop.f32.mrb[0].mxu0
    %v377 = vadd.f32 0.0, %v376
    %v378 = vpop.f32.mrb[0].mxu0
    %v379 = vadd.f32 0.0, %v378
    %v380 = vpop.f32.mrb[0].mxu0
    %v381 = vadd.f32 0.0, %v380
    %v382 = vpop.f32.mrb[0].mxu0
    %v383 = vadd.f32 0.0, %v382
    %384 = vdwg.mxu0
    %385 = vmatprep.subr.bf16.mxu0 0
    %386 = vmatpush1.bf16.msra.mxu0 %v266
    %387 = vmatprep.subr.bf16.mxu0 0
    %388 = vmatpush1.bf16.msra.mxu0 %v269
    %389 = vmatprep.subr.bf16.mxu0 0
    %390 = vmatpush1.bf16.msra.mxu0 %v272
    %391 = vmatprep.subr.bf16.mxu0 0
    %392 = vmatpush1.bf16.msra.mxu0 %v275
    %393 = vmatprep.subr.bf16.mxu0 0
    %394 = vmatpush1.bf16.msra.mxu0 %v278
    %395 = vmatprep.subr.bf16.mxu0 0
    %396 = vmatpush1.bf16.msra.mxu0 %v281
    %397 = vmatprep.subr.bf16.mxu0 0
    %398 = vmatpush1.bf16.msra.mxu0 %v284
    %399 = vmatprep.subr.bf16.mxu0 0
    %400 = vmatpush1.bf16.msra.mxu0 %v287
    %401 = vmatprep.subr.bf16.mxu0 0
    %402 = vmatpush1.bf16.msra.mxu0 0
    %403 = vmatprep.subr.bf16.mxu0 0
    %404 = vmatpush1.bf16.msra.mxu0 0
    %405 = vmatprep.subr.bf16.mxu0 0
    %406 = vmatpush1.bf16.msra.mxu0 0
    %407 = vmatprep.subr.bf16.mxu0 0
    %408 = vmatpush1.bf16.msra.mxu0 0
    %409 = vmatprep.subr.bf16.mxu0 0
    %410 = vmatpush1.bf16.msra.mxu0 0
    %411 = vmatprep.subr.bf16.mxu0 0
    %412 = vmatpush1.bf16.msra.mxu0 0
    %413 = vmatprep.subr.bf16.mxu0 0
    %414 = vmatpush1.bf16.msra.mxu0 0
    %415 = vmatprep.subr.bf16.mxu0 0
    %416 = vmatpush1.bf16.msra.mxu0 0
    %417 = vmatprep.mubr.bf16.mxu0 0
    %418 = vmatmul.mubr.bf16.gmra.mrb[0].mxu0 %v148
    %v419 = vpop.f32.mrb[0].mxu0
    %v420 = vadd.f32 0.0, %v419
    %v421 = vpop.f32.mrb[0].mxu0
    %v422 = vpop.f32.mrb[0].mxu0
    %v423 = vadd.f32 0.0, %v422
    %v424 = vpop.f32.mrb[0].mxu0
    %425 = vmatprep.mubr.bf16.mxu0 0
    %426 = vmatmul.mubr.bf16.gmra.mrb[0].mxu0 %v149
    %v427 = vpop.f32.mrb[0].mxu0
    %v428 = vadd.f32 0.0, %v427
    %v429 = vpop.f32.mrb[0].mxu0
    %v430 = vpop.f32.mrb[0].mxu0
    %v431 = vadd.f32 0.0, %v430
    %v432 = vpop.f32.mrb[0].mxu0
    %433 = vmatprep.mubr.bf16.mxu0 0
    %434 = vmatmul.mubr.bf16.gmra.mrb[0].mxu0 %v150
    %v435 = vpop.f32.mrb[0].mxu0
    %v436 = vadd.f32 0.0, %v435
    %v437 = vpop.f32.mrb[0].mxu0
    %v438 = vpop.f32.mrb[0].mxu0
    %v439 = vadd.f32 0.0, %v438
    %v440 = vpop.f32.mrb[0].mxu0
    %441 = vmatprep.mubr.bf16.mxu0 0
    %442 = vmatmul.mubr.bf16.gmra.mrb[0].mxu0 %v151
    %v443 = vpop.f32.mrb[0].mxu0
    %v444 = vadd.f32 0.0, %v443
    %v445 = vpop.f32.mrb[0].mxu0
    %v446 = vpop.f32.mrb[0].mxu0
    %v447 = vadd.f32 0.0, %v446
    %v448 = vpop.f32.mrb[0].mxu0
    %449 = vdwg.mxu0
    %v450 = vrot.slane %v347, 7
    %v451 = vrot.slane %v351, 7
    %v452 = vrot.slane %v357, 7
    %v453 = vrot.slane %v361, 7
    %v454 = vrot.slane %v367, 7
    %v455 = vrot.slane %v371, 7
    %v456 = vrot.slane %v377, 7
    %v457 = vrot.slane %v381, 7
    %vm458 = vcmp.lt.s32.totalorder %v142, 1
    %v459 = vsel %vm458, %v456, %v457
    %v460 = vsel %vm458, %v455, %v456
    %v461 = vsel %vm458, %v454, %v455
    %v462 = vsel %vm458, %v453, %v454
    %v463 = vsel %vm458, %v452, %v453
    %v464 = vsel %vm458, %v451, %v452
    %v465 = vsel %vm458, %v450, %v451
    %v466 = vsel %vm458, %v457, %v450
    %v467 = vsel %vm144, 1, 0
    %v468 = vsel %vm145, 1, 0
    %vm469 = vcmp.eq.s32.totalorder %v467, 1
    %vm470 = vcmp.eq.s32.totalorder %v468, 1
    %v471 = vsel %vm469, 0.0, %v466
    %v472 = vsel %vm470, 0.0, %v465
    %v473 = vsel %vm469, 0.0, %v464
    %v474 = vsel %vm470, 0.0, %v463
    %v475 = vsel %vm469, 0.0, %v462
    %v476 = vsel %vm470, 0.0, %v461
    %v477 = vsel %vm469, 0.0, %v460
    %v478 = vsel %vm470, 0.0, %v459
    %v479 = vadd.f32 %v349, %v471
    %v480 = vadd.f32 %v353, %v472
    %v481 = vadd.f32 %v359, %v473
    %v482 = vadd.f32 %v363, %v474
    %v483 = vadd.f32 %v369, %v475
    %v484 = vadd.f32 %v373, %v476
    %v485 = vadd.f32 %v379, %v477
    %v486 = vadd.f32 %v383, %v478
    %v487 = vrot.slane %v420, 1
    %v488 = vrot.slane %v423, 1
    %v489 = vrot.slane %v428, 1
    %v490 = vrot.slane %v431, 1
    %v491 = vrot.slane %v436, 1
    %v492 = vrot.slane %v439, 1
    %v493 = vrot.slane %v444, 1
    %v494 = vrot.slane %v447, 1
    %vm495 = vcmp.lt.s32.totalorder %v142, 7
    %v496 = vsel %vm495, %v493, %v494
    %v497 = vsel %vm495, %v492, %v493
    %v498 = vsel %vm495, %v491, %v492
    %v499 = vsel %vm495, %v490, %v491
    %v500 = vsel %vm495, %v489, %v490
    %v501 = vsel %vm495, %v488, %v489
    %v502 = vsel %vm495, %v487, %v488
    %v503 = vsel %vm495, %v494, %v487
    %v504 = vsel %vm146, 1, 0
    %v505 = vsel %vm147, 1, 0
    %vm506 = vcmp.eq.s32.totalorder %v504, 1
    %vm507 = vcmp.eq.s32.totalorder %v505, 1
    %v508 = vsel %vm506, 0.0, %v502
    %v509 = vsel %vm507, 0.0, %v501
    %v510 = vsel %vm506, 0.0, %v500
    %v511 = vsel %vm507, 0.0, %v499
    %v512 = vsel %vm506, 0.0, %v498
    %v513 = vsel %vm507, 0.0, %v497
    %v514 = vsel %vm506, 0.0, %v496
    %v515 = vsel %vm507, 0.0, %v503
    %v516 = vadd.f32 %v479, %v508
    %v517 = vadd.f32 %v480, %v509
    %v518 = vadd.f32 %v481, %v510
    %v519 = vadd.f32 %v482, %v511
    %v520 = vadd.f32 %v483, %v512
    %v521 = vadd.f32 %v484, %v513
    %v522 = vadd.f32 %v485, %v514
    %v523 = vadd.f32 %v486, %v515
    %v524 = vld [vmem:[%s4] sm:$0x1]
    %v525 = vlaneseq
    %v526 = vshrl.u32 %v525, 7
    %v527 = vsub.s32 0, %v526
    %v528 = vrot.slane %v524, %v527
    %v529 = vmul.f32 %v516, %v528
    %v530 = vmul.f32 %v517, %v528
    %v531 = vmul.f32 %v518, %v528
    %v532 = vmul.f32 %v519, %v528
    %v533 = vmul.f32 %v520, %v528
    %v534 = vmul.f32 %v521, %v528
    %v535 = vmul.f32 %v522, %v528
    %v536 = vmul.f32 %v523, %v528
    %v537 = vld [vmem:[%s5] sm:$0x1]
    %v538 = vlaneseq
    %v539 = vshrl.u32 %v538, 7
    %v540 = vsub.s32 0, %v539
    %v541 = vrot.slane %v537, %v540
    %v542 = vadd.f32 %v529, %v541
    %v543 = vadd.f32 %v530, %v541
    %v544 = vadd.f32 %v531, %v541
    %v545 = vadd.f32 %v532, %v541
    %v546 = vadd.f32 %v533, %v541
    %v547 = vadd.f32 %v534, %v541
    %v548 = vadd.f32 %v535, %v541
    %v549 = vadd.f32 %v536, %v541
    %v550 = vmax.f32 %v542, 0.0
    %v551 = vmax.f32 %v543, 0.0
    %v552 = vmax.f32 %v544, 0.0
    %v553 = vmax.f32 %v545, 0.0
    %v554 = vmax.f32 %v546, 0.0
    %v555 = vmax.f32 %v547, 0.0
    %v556 = vmax.f32 %v548, 0.0
    %v557 = vmax.f32 %v549, 0.0
    %v558 = vpack.c.bf16 %v551, %v550
    %v559 = vpack.c.bf16 %v553, %v552
    %v560 = vpack.c.bf16 %v555, %v554
    %v561 = vpack.c.bf16 %v557, %v556
    %s562 = scalar_lea.vmem [#allocation2], 192
    %v563 = vld [vmem:[%s562] sm:$0xff]
    %v564 = vld [vmem:[%s562 + $0x8] sm:$0xf]
    %v565 = vld [vmem:[%s562 + $0xc] sm:$0xff]
    %v566 = vld [vmem:[%s562 + $0x14] sm:$0xf]
    %v567 = vld [vmem:[%s562 + $0x18] sm:$0xff]
    %v568 = vld [vmem:[%s562 + $0x20] sm:$0xf]
    %v569 = vld [vmem:[%s562 + $0x24] sm:$0xff]
    %v570 = vld [vmem:[%s562 + $0x2c] sm:$0xf]
    %v571 = vld [vmem:[%s562 + $0x30] sm:$0xff]
    %v572 = vld [vmem:[%s562 + $0x38] sm:$0xf]
    %v573 = vld [vmem:[%s562 + $0x3c] sm:$0xff]
    %v574 = vld [vmem:[%s562 + $0x44] sm:$0xf]
    %v575 = vld [vmem:[%s562 + $0x48] sm:$0xff]
    %v576 = vld [vmem:[%s562 + $0x50] sm:$0xf]
    %v577 = vld [vmem:[%s562 + $0x54] sm:$0xff]
    %v578 = vld [vmem:[%s562 + $0x5c] sm:$0xf]
    %v579 = vld [vmem:[%s562 + $0x60] sm:$0xff]
    %v580 = vld [vmem:[%s562 + $0x68] sm:$0xf]
    %v581 = vld [vmem:[%s562 + $0x6c] sm:$0xff]
    %v582 = vld [vmem:[%s562 + $0x74] sm:$0xf]
    %v583 = vld [vmem:[%s562 + $0x78] sm:$0xff]
    %v584 = vld [vmem:[%s562 + $0x80] sm:$0xf]
    %v585 = vld [vmem:[%s562 + $0x84] sm:$0xff]
    %v586 = vld [vmem:[%s562 + $0x8c] sm:$0xf]
    %v587 = vld [vmem:[%s562 + $0x90] sm:$0xff]
    %v588 = vld [vmem:[%s562 + $0x98] sm:$0xf]
    %v589 = vld [vmem:[%s562 + $0x9c] sm:$0xff]
    %v590 = vld [vmem:[%s562 + $0xa4] sm:$0xf]
    %v591 = vld [vmem:[%s562 + $0xa8] sm:$0xff]
    %v592 = vld [vmem:[%s562 + $0xb0] sm:$0xf]
    %v593 = vld [vmem:[%s562 + $0xb4] sm:$0xff]
    %v594 = vld [vmem:[%s562 + $0xbc] sm:$0xf]
    %v627 = vunpack.c.l.b16 %v563
    %v628 = vunpack.c.h.b16 %v563
    %v629 = vunpack.c.l.b16 %v564
    %v630 = vunpack.c.l.b16 %v565
    %v631 = vunpack.c.h.b16 %v565
    %v632 = vunpack.c.l.b16 %v566
    %v633 = vunpack.c.l.b16 %v567
    %v634 = vunpack.c.h.b16 %v567
    %v635 = vunpack.c.l.b16 %v568
    %v636 = vunpack.c.l.b16 %v569
    %v637 = vunpack.c.h.b16 %v569
    %v638 = vunpack.c.l.b16 %v570
    %v639 = vunpack.c.l.b16 %v571
    %v640 = vunpack.c.h.b16 %v571
    %v641 = vunpack.c.l.b16 %v572
    %v642 = vunpack.c.l.b16 %v573
    %v643 = vunpack.c.h.b16 %v573
    %v644 = vunpack.c.l.b16 %v574
    %v645 = vunpack.c.l.b16 %v575
    %v646 = vunpack.c.h.b16 %v575
    %v647 = vunpack.c.l.b16 %v576
    %v648 = vunpack.c.l.b16 %v577
    %v649 = vunpack.c.h.b16 %v577
    %v650 = vunpack.c.l.b16 %v578
    %v651 = vunpack.c.l.b16 %v579
    %v652 = vunpack.c.h.b16 %v579
    %v653 = vunpack.c.l.b16 %v580
    %v654 = vunpack.c.l.b16 %v581
    %v655 = vunpack.c.h.b16 %v581
    %v656 = vunpack.c.l.b16 %v582
    %v657 = vunpack.c.l.b16 %v583
    %v658 = vunpack.c.h.b16 %v583
    %v659 = vunpack.c.l.b16 %v584
    %v660 = vunpack.c.l.b16 %v585
    %v661 = vunpack.c.h.b16 %v585
    %v662 = vunpack.c.l.b16 %v586
    %v663 = vunpack.c.l.b16 %v587
    %v664 = vunpack.c.h.b16 %v587
    %v665 = vunpack.c.l.b16 %v588
    %v666 = vunpack.c.l.b16 %v589
    %v667 = vunpack.c.h.b16 %v589
    %v668 = vunpack.c.l.b16 %v590
    %v669 = vunpack.c.l.b16 %v591
    %v670 = vunpack.c.h.b16 %v591
    %v671 = vunpack.c.l.b16 %v592
    %v672 = vunpack.c.l.b16 %v593
    %v673 = vunpack.c.h.b16 %v593
    %v674 = vunpack.c.l.b16 %v594
    %v675 = vpack.c.b16 %v630, %v627
    %v676 = vpack.c.b16 %v631, %v628
    %v677 = vpack.c.b16 %v632, %v629
    %v678 = vpack.c.b16 %v636, %v633
    %v679 = vpack.c.b16 %v637, %v634
    %v680 = vpack.c.b16 %v638, %v635
    %v681 = vpack.c.b16 %v642, %v639
    %v682 = vpack.c.b16 %v643, %v640
    %v683 = vpack.c.b16 %v644, %v641
    %v684 = vpack.c.b16 %v648, %v645
    %v685 = vpack.c.b16 %v649, %v646
    %v686 = vpack.c.b16 %v650, %v647
    %v687 = vpack.c.b16 %v654, %v651
    %v688 = vpack.c.b16 %v655, %v652
    %v689 = vpack.c.b16 %v656, %v653
    %v690 = vpack.c.b16 %v660, %v657
    %v691 = vpack.c.b16 %v661, %v658
    %v692 = vpack.c.b16 %v662, %v659
    %v693 = vpack.c.b16 %v666, %v663
    %v694 = vpack.c.b16 %v667, %v664
    %v695 = vpack.c.b16 %v668, %v665
    %v696 = vpack.c.b16 %v672, %v669
    %v697 = vpack.c.b16 %v673, %v670
    %v698 = vpack.c.b16 %v674, %v671
    %723 = vmatprep.subr.bf16.mxu0 %v676
    %724 = vmatpush1.bf16.msra.mxu0 %v675
    %725 = vmatprep.subr.bf16.mxu0 %v679
    %726 = vmatpush1.bf16.msra.mxu0 %v678
    %727 = vmatprep.subr.bf16.mxu0 %v682
    %728 = vmatpush1.bf16.msra.mxu0 %v681
    %729 = vmatprep.subr.bf16.mxu0 %v685
    %730 = vmatpush1.bf16.msra.mxu0 %v684
    %731 = vmatprep.subr.bf16.mxu0 %v688
    %732 = vmatpush1.bf16.msra.mxu0 %v687
    %733 = vmatprep.subr.bf16.mxu0 %v691
    %734 = vmatpush1.bf16.msra.mxu0 %v690
    %735 = vmatprep.subr.bf16.mxu0 %v694
    %736 = vmatpush1.bf16.msra.mxu0 %v693
    %737 = vmatprep.subr.bf16.mxu0 %v697
    %738 = vmatpush1.bf16.msra.mxu0 %v696
    %739 = vmatprep.subr.bf16.mxu0 0
    %740 = vmatpush1.bf16.msra.mxu0 0
    %741 = vmatprep.subr.bf16.mxu0 0
    %742 = vmatpush1.bf16.msra.mxu0 0
    %743 = vmatprep.subr.bf16.mxu0 0
    %744 = vmatpush1.bf16.msra.mxu0 0
    %745 = vmatprep.subr.bf16.mxu0 0
    %746 = vmatpush1.bf16.msra.mxu0 0
    %747 = vmatprep.subr.bf16.mxu0 0
    %748 = vmatpush1.bf16.msra.mxu0 0
    %749 = vmatprep.subr.bf16.mxu0 0
    %750 = vmatpush1.bf16.msra.mxu0 0
    %751 = vmatprep.subr.bf16.mxu0 0
    %752 = vmatpush1.bf16.msra.mxu0 0
    %753 = vmatprep.subr.bf16.mxu0 0
    %754 = vmatpush1.bf16.msra.mxu0 0
    %755 = vmatprep.mubr.bf16.mxu0 0
    %756 = vmatmul.mubr.bf16.gmra.mrb[0].mxu0 %v558
    %v757 = vpop.f32.mrb[0].mxu0
    %v758 = vadd.f32 0.0, %v757
    %v759 = vpop.f32.mrb[0].mxu0
    %v760 = vadd.f32 0.0, %v759
    %v761 = vpop.f32.mrb[0].mxu0
    %v762 = vadd.f32 0.0, %v761
    %v763 = vpop.f32.mrb[0].mxu0
    %v764 = vadd.f32 0.0, %v763
    %765 = vmatprep.mubr.bf16.mxu0 0
    %766 = vmatmul.mubr.bf16.gmra.mrb[0].mxu0 %v559
    %v767 = vpop.f32.mrb[0].mxu0
    %v768 = vadd.f32 0.0, %v767
    %v769 = vpop.f32.mrb[0].mxu0
    %v770 = vadd.f32 0.0, %v769
    %v771 = vpop.f32.mrb[0].mxu0
    %v772 = vadd.f32 0.0, %v771
    %v773 = vpop.f32.mrb[0].mxu0
    %v774 = vadd.f32 0.0, %v773
    %775 = vmatprep.mubr.bf16.mxu0 0
    %776 = vmatmul.mubr.bf16.gmra.mrb[0].mxu0 %v560
    %v777 = vpop.f32.mrb[0].mxu0
    %v778 = vadd.f32 0.0, %v777
    %v779 = vpop.f32.mrb[0].mxu0
    %v780 = vadd.f32 0.0, %v779
    %v781 = vpop.f32.mrb[0].mxu0
    %v782 = vadd.f32 0.0, %v781
    %v783 = vpop.f32.mrb[0].mxu0
    %v784 = vadd.f32 0.0, %v783
    %785 = vmatprep.mubr.bf16.mxu0 0
    %786 = vmatmul.mubr.bf16.gmra.mrb[0].mxu0 %v561
    %v787 = vpop.f32.mrb[0].mxu0
    %v788 = vadd.f32 0.0, %v787
    %v789 = vpop.f32.mrb[0].mxu0
    %v790 = vadd.f32 0.0, %v789
    %v791 = vpop.f32.mrb[0].mxu0
    %v792 = vadd.f32 0.0, %v791
    %v793 = vpop.f32.mrb[0].mxu0
    %v794 = vadd.f32 0.0, %v793
    %795 = vdwg.mxu0
    %796 = vmatprep.subr.bf16.mxu0 0
    %797 = vmatpush1.bf16.msra.mxu0 %v677
    %798 = vmatprep.subr.bf16.mxu0 0
    %799 = vmatpush1.bf16.msra.mxu0 %v680
    %800 = vmatprep.subr.bf16.mxu0 0
    %801 = vmatpush1.bf16.msra.mxu0 %v683
    %802 = vmatprep.subr.bf16.mxu0 0
    %803 = vmatpush1.bf16.msra.mxu0 %v686
    %804 = vmatprep.subr.bf16.mxu0 0
    %805 = vmatpush1.bf16.msra.mxu0 %v689
    %806 = vmatprep.subr.bf16.mxu0 0
    %807 = vmatpush1.bf16.msra.mxu0 %v692
    %808 = vmatprep.subr.bf16.mxu0 0
    %809 = vmatpush1.bf16.msra.mxu0 %v695
    %810 = vmatprep.subr.bf16.mxu0 0
    %811 = vmatpush1.bf16.msra.mxu0 %v698
    %812 = vmatprep.subr.bf16.mxu0 0
    %813 = vmatpush1.bf16.msra.mxu0 0
    %814 = vmatprep.subr.bf16.mxu0 0
    %815 = vmatpush1.bf16.msra.mxu0 0
    %816 = vmatprep.subr.bf16.mxu0 0
    %817 = vmatpush1.bf16.msra.mxu0 0
    %818 = vmatprep.subr.bf16.mxu0 0
    %819 = vmatpush1.bf16.msra.mxu0 0
    %820 = vmatprep.subr.bf16.mxu0 0
    %821 = vmatpush1.bf16.msra.mxu0 0
    %822 = vmatprep.subr.bf16.mxu0 0
    %823 = vmatpush1.bf16.msra.mxu0 0
    %824 = vmatprep.subr.bf16.mxu0 0
    %825 = vmatpush1.bf16.msra.mxu0 0
    %826 = vmatprep.subr.bf16.mxu0 0
    %827 = vmatpush1.bf16.msra.mxu0 0
    %828 = vmatprep.mubr.bf16.mxu0 0
    %829 = vmatmul.mubr.bf16.gmra.mrb[0].mxu0 %v558
    %v830 = vpop.f32.mrb[0].mxu0
    %v831 = vadd.f32 0.0, %v830
    %v832 = vpop.f32.mrb[0].mxu0
    %v833 = vpop.f32.mrb[0].mxu0
    %v834 = vadd.f32 0.0, %v833
    %v835 = vpop.f32.mrb[0].mxu0
    %836 = vmatprep.mubr.bf16.mxu0 0
    %837 = vmatmul.mubr.bf16.gmra.mrb[0].mxu0 %v559
    %v838 = vpop.f32.mrb[0].mxu0
    %v839 = vadd.f32 0.0, %v838
    %v840 = vpop.f32.mrb[0].mxu0
    %v841 = vpop.f32.mrb[0].mxu0
    %v842 = vadd.f32 0.0, %v841
    %v843 = vpop.f32.mrb[0].mxu0
    %844 = vmatprep.mubr.bf16.mxu0 0
    %845 = vmatmul.mubr.bf16.gmra.mrb[0].mxu0 %v560
    %v846 = vpop.f32.mrb[0].mxu0
    %v847 = vadd.f32 0.0, %v846
    %v848 = vpop.f32.mrb[0].mxu0
    %v849 = vpop.f32.mrb[0].mxu0
    %v850 = vadd.f32 0.0, %v849
    %v851 = vpop.f32.mrb[0].mxu0
    %852 = vmatprep.mubr.bf16.mxu0 0
    %853 = vmatmul.mubr.bf16.gmra.mrb[0].mxu0 %v561
    %v854 = vpop.f32.mrb[0].mxu0
    %v855 = vadd.f32 0.0, %v854
    %v856 = vpop.f32.mrb[0].mxu0
    %v857 = vpop.f32.mrb[0].mxu0
    %v858 = vadd.f32 0.0, %v857
    %v859 = vpop.f32.mrb[0].mxu0
    %860 = vdwg.mxu0
    %v861 = vrot.slane %v758, 7
    %v862 = vrot.slane %v762, 7
    %v863 = vrot.slane %v768, 7
    %v864 = vrot.slane %v772, 7
    %v865 = vrot.slane %v778, 7
    %v866 = vrot.slane %v782, 7
    %v867 = vrot.slane %v788, 7
    %v868 = vrot.slane %v792, 7
    %v869 = vsel %vm458, %v867, %v868
    %v870 = vsel %vm458, %v866, %v867
    %v871 = vsel %vm458, %v865, %v866
    %v872 = vsel %vm458, %v864, %v865
    %v873 = vsel %vm458, %v863, %v864
    %v874 = vsel %vm458, %v862, %v863
    %v875 = vsel %vm458, %v861, %v862
    %v876 = vsel %vm458, %v868, %v861
    %v877 = vsel %vm469, 0.0, %v876
    %v878 = vsel %vm470, 0.0, %v875
    %v879 = vsel %vm469, 0.0, %v874
    %v880 = vsel %vm470, 0.0, %v873
    %v881 = vsel %vm469, 0.0, %v872
    %v882 = vsel %vm470, 0.0, %v871
    %v883 = vsel %vm469, 0.0, %v870
    %v884 = vsel %vm470, 0.0, %v869
    %v885 = vadd.f32 %v760, %v877
    %v886 = vadd.f32 %v764, %v878
    %v887 = vadd.f32 %v770, %v879
    %v888 = vadd.f32 %v774, %v880
    %v889 = vadd.f32 %v780, %v881
    %v890 = vadd.f32 %v784, %v882
    %v891 = vadd.f32 %v790, %v883
    %v892 = vadd.f32 %v794, %v884
    %v893 = vrot.slane %v831, 1
    %v894 = vrot.slane %v834, 1
    %v895 = vrot.slane %v839, 1
    %v896 = vrot.slane %v842, 1
    %v897 = vrot.slane %v847, 1
    %v898 = vrot.slane %v850, 1
    %v899 = vrot.slane %v855, 1
    %v900 = vrot.slane %v858, 1
    %v901 = vsel %vm495, %v899, %v900
    %v902 = vsel %vm495, %v898, %v899
    %v903 = vsel %vm495, %v897, %v898
    %v904 = vsel %vm495, %v896, %v897
    %v905 = vsel %vm495, %v895, %v896
    %v906 = vsel %vm495, %v894, %v895
    %v907 = vsel %vm495, %v893, %v894
    %v908 = vsel %vm495, %v900, %v893
    %v909 = vsel %vm506, 0.0, %v907
    %v910 = vsel %vm507, 0.0, %v906
    %v911 = vsel %vm506, 0.0, %v905
    %v912 = vsel %vm507, 0.0, %v904
    %v913 = vsel %vm506, 0.0, %v903
    %v914 = vsel %vm507, 0.0, %v902
    %v915 = vsel %vm506, 0.0, %v901
    %v916 = vsel %vm507, 0.0, %v908
    %v917 = vadd.f32 %v885, %v909
    %v918 = vadd.f32 %v886, %v910
    %v919 = vadd.f32 %v887, %v911
    %v920 = vadd.f32 %v888, %v912
    %v921 = vadd.f32 %v889, %v913
    %v922 = vadd.f32 %v890, %v914
    %v923 = vadd.f32 %v891, %v915
    %v924 = vadd.f32 %v892, %v916
    %v925 = vld [vmem:[%s4 + $0x1] sm:$0x1]
    %v926 = vlaneseq
    %v927 = vshrl.u32 %v926, 7
    %v928 = vsub.s32 0, %v927
    %v929 = vrot.slane %v925, %v928
    %v930 = vmul.f32 %v917, %v929
    %v931 = vmul.f32 %v918, %v929
    %v932 = vmul.f32 %v919, %v929
    %v933 = vmul.f32 %v920, %v929
    %v934 = vmul.f32 %v921, %v929
    %v935 = vmul.f32 %v922, %v929
    %v936 = vmul.f32 %v923, %v929
    %v937 = vmul.f32 %v924, %v929
    %v938 = vld [vmem:[%s5 + $0x1] sm:$0x1]
    %v939 = vlaneseq
    %v940 = vshrl.u32 %v939, 7
    %v941 = vsub.s32 0, %v940
    %v942 = vrot.slane %v938, %v941
    %v943 = vadd.f32 %v930, %v942
    %v944 = vadd.f32 %v931, %v942
    %v945 = vadd.f32 %v932, %v942
    %v946 = vadd.f32 %v933, %v942
    %v947 = vadd.f32 %v934, %v942
    %v948 = vadd.f32 %v935, %v942
    %v949 = vadd.f32 %v936, %v942
    %v950 = vadd.f32 %v937, %v942
    %v951 = vmax.f32 %v943, 0.0
    %v952 = vmax.f32 %v944, 0.0
    %v953 = vmax.f32 %v945, 0.0
    %v954 = vmax.f32 %v946, 0.0
    %v955 = vmax.f32 %v947, 0.0
    %v956 = vmax.f32 %v948, 0.0
    %v957 = vmax.f32 %v949, 0.0
    %v958 = vmax.f32 %v950, 0.0
    %v959 = vpack.c.bf16 %v952, %v951
    %v960 = vpack.c.bf16 %v954, %v953
    %v961 = vpack.c.bf16 %v956, %v955
    %v962 = vpack.c.bf16 %v958, %v957
    %s963 = scalar_lea.vmem [#allocation2], 384
    %v964 = vld [vmem:[%s963] sm:$0xff]
    %v965 = vld [vmem:[%s963 + $0x8] sm:$0xf]
    %v966 = vld [vmem:[%s963 + $0xc] sm:$0xff]
    %v967 = vld [vmem:[%s963 + $0x14] sm:$0xf]
    %v968 = vld [vmem:[%s963 + $0x18] sm:$0xff]
    %v969 = vld [vmem:[%s963 + $0x20] sm:$0xf]
    %v970 = vld [vmem:[%s963 + $0x24] sm:$0xff]
    %v971 = vld [vmem:[%s963 + $0x2c] sm:$0xf]
    %v972 = vld [vmem:[%s963 + $0x30] sm:$0xff]
    %v973 = vld [vmem:[%s963 + $0x38] sm:$0xf]
    %v974 = vld [vmem:[%s963 + $0x3c] sm:$0xff]
    %v975 = vld [vmem:[%s963 + $0x44] sm:$0xf]
    %v976 = vld [vmem:[%s963 + $0x48] sm:$0xff]
    %v977 = vld [vmem:[%s963 + $0x50] sm:$0xf]
    %v978 = vld [vmem:[%s963 + $0x54] sm:$0xff]
    %v979 = vld [vmem:[%s963 + $0x5c] sm:$0xf]
    %v980 = vld [vmem:[%s963 + $0x60] sm:$0xff]
    %v981 = vld [vmem:[%s963 + $0x68] sm:$0xf]
    %v982 = vld [vmem:[%s963 + $0x6c] sm:$0xff]
    %v983 = vld [vmem:[%s963 + $0x74] sm:$0xf]
    %v984 = vld [vmem:[%s963 + $0x78] sm:$0xff]
    %v985 = vld [vmem:[%s963 + $0x80] sm:$0xf]
    %v986 = vld [vmem:[%s963 + $0x84] sm:$0xff]
    %v987 = vld [vmem:[%s963 + $0x8c] sm:$0xf]
    %v988 = vld [vmem:[%s963 + $0x90] sm:$0xff]
    %v989 = vld [vmem:[%s963 + $0x98] sm:$0xf]
    %v990 = vld [vmem:[%s963 + $0x9c] sm:$0xff]
    %v991 = vld [vmem:[%s963 + $0xa4] sm:$0xf]
    %v992 = vld [vmem:[%s963 + $0xa8] sm:$0xff]
    %v993 = vld [vmem:[%s963 + $0xb0] sm:$0xf]
    %v994 = vld [vmem:[%s963 + $0xb4] sm:$0xff]
    %v995 = vld [vmem:[%s963 + $0xbc] sm:$0xf]
    %v1028 = vunpack.c.l.b16 %v964
    %v1029 = vunpack.c.h.b16 %v964
    %v1030 = vunpack.c.l.b16 %v965
    %v1031 = vunpack.c.l.b16 %v966
    %v1032 = vunpack.c.h.b16 %v966
    %v1033 = vunpack.c.l.b16 %v967
    %v1034 = vunpack.c.l.b16 %v968
    %v1035 = vunpack.c.h.b16 %v968
    %v1036 = vunpack.c.l.b16 %v969
    %v1037 = vunpack.c.l.b16 %v970
    %v1038 = vunpack.c.h.b16 %v970
    %v1039 = vunpack.c.l.b16 %v971
    %v1040 = vunpack.c.l.b16 %v972
    %v1041 = vunpack.c.h.b16 %v972
    %v1042 = vunpack.c.l.b16 %v973
    %v1043 = vunpack.c.l.b16 %v974
    %v1044 = vunpack.c.h.b16 %v974
    %v1045 = vunpack.c.l.b16 %v975
    %v1046 = vunpack.c.l.b16 %v976
    %v1047 = vunpack.c.h.b16 %v976
    %v1048 = vunpack.c.l.b16 %v977
    %v1049 = vunpack.c.l.b16 %v978
    %v1050 = vunpack.c.h.b16 %v978
    %v1051 = vunpack.c.l.b16 %v979
    %v1052 = vunpack.c.l.b16 %v980
    %v1053 = vunpack.c.h.b16 %v980
    %v1054 = vunpack.c.l.b16 %v981
    %v1055 = vunpack.c.l.b16 %v982
    %v1056 = vunpack.c.h.b16 %v982
    %v1057 = vunpack.c.l.b16 %v983
    %v1058 = vunpack.c.l.b16 %v984
    %v1059 = vunpack.c.h.b16 %v984
    %v1060 = vunpack.c.l.b16 %v985
    %v1061 = vunpack.c.l.b16 %v986
    %v1062 = vunpack.c.h.b16 %v986
    %v1063 = vunpack.c.l.b16 %v987
    %v1064 = vunpack.c.l.b16 %v988
    %v1065 = vunpack.c.h.b16 %v988
    %v1066 = vunpack.c.l.b16 %v989
    %v1067 = vunpack.c.l.b16 %v990
    %v1068 = vunpack.c.h.b16 %v990
    %v1069 = vunpack.c.l.b16 %v991
    %v1070 = vunpack.c.l.b16 %v992
    %v1071 = vunpack.c.h.b16 %v992
    %v1072 = vunpack.c.l.b16 %v993
    %v1073 = vunpack.c.l.b16 %v994
    %v1074 = vunpack.c.h.b16 %v994
    %v1075 = vunpack.c.l.b16 %v995
    %v1076 = vpack.c.b16 %v1031, %v1028
    %v1077 = vpack.c.b16 %v1032, %v1029
    %v1078 = vpack.c.b16 %v1033, %v1030
    %v1079 = vpack.c.b16 %v1037, %v1034
    %v1080 = vpack.c.b16 %v1038, %v1035
    %v1081 = vpack.c.b16 %v1039, %v1036
    %v1082 = vpack.c.b16 %v1043, %v1040
    %v1083 = vpack.c.b16 %v1044, %v1041
    %v1084 = vpack.c.b16 %v1045, %v1042
    %v1085 = vpack.c.b16 %v1049, %v1046
    %v1086 = vpack.c.b16 %v1050, %v1047
    %v1087 = vpack.c.b16 %v1051, %v1048
    %v1088 = vpack.c.b16 %v1055, %v1052
    %v1089 = vpack.c.b16 %v1056, %v1053
    %v1090 = vpack.c.b16 %v1057, %v1054
    %v1091 = vpack.c.b16 %v1061, %v1058
    %v1092 = vpack.c.b16 %v1062, %v1059
    %v1093 = vpack.c.b16 %v1063, %v1060
    %v1094 = vpack.c.b16 %v1067, %v1064
    %v1095 = vpack.c.b16 %v1068, %v1065
    %v1096 = vpack.c.b16 %v1069, %v1066
    %v1097 = vpack.c.b16 %v1073, %v1070
    %v1098 = vpack.c.b16 %v1074, %v1071
    %v1099 = vpack.c.b16 %v1075, %v1072
    %1124 = vmatprep.subr.bf16.mxu0 %v1077
    %1125 = vmatpush1.bf16.msra.mxu0 %v1076
    %1126 = vmatprep.subr.bf16.mxu0 %v1080
    %1127 = vmatpush1.bf16.msra.mxu0 %v1079
    %1128 = vmatprep.subr.bf16.mxu0 %v1083
    %1129 = vmatpush1.bf16.msra.mxu0 %v1082
    %1130 = vmatprep.subr.bf16.mxu0 %v1086
    %1131 = vmatpush1.bf16.msra.mxu0 %v1085
    %1132 = vmatprep.subr.bf16.mxu0 %v1089
    %1133 = vmatpush1.bf16.msra.mxu0 %v1088
    %1134 = vmatprep.subr.bf16.mxu0 %v1092
    %1135 = vmatpush1.bf16.msra.mxu0 %v1091
    %1136 = vmatprep.subr.bf16.mxu0 %v1095
    %1137 = vmatpush1.bf16.msra.mxu0 %v1094
    %1138 = vmatprep.subr.bf16.mxu0 %v1098
    %1139 = vmatpush1.bf16.msra.mxu0 %v1097
    %1140 = vmatprep.subr.bf16.mxu0 0
    %1141 = vmatpush1.bf16.msra.mxu0 0
    %1142 = vmatprep.subr.bf16.mxu0 0
    %1143 = vmatpush1.bf16.msra.mxu0 0
    %1144 = vmatprep.subr.bf16.mxu0 0
    %1145 = vmatpush1.bf16.msra.mxu0 0
    %1146 = vmatprep.subr.bf16.mxu0 0
    %1147 = vmatpush1.bf16.msra.mxu0 0
    %1148 = vmatprep.subr.bf16.mxu0 0
    %1149 = vmatpush1.bf16.msra.mxu0 0
    %1150 = vmatprep.subr.bf16.mxu0 0
    %1151 = vmatpush1.bf16.msra.mxu0 0
    %1152 = vmatprep.subr.bf16.mxu0 0
    %1153 = vmatpush1.bf16.msra.mxu0 0
    %1154 = vmatprep.subr.bf16.mxu0 0
    %1155 = vmatpush1.bf16.msra.mxu0 0
    %1156 = vmatprep.mubr.bf16.mxu0 0
    %1157 = vmatmul.mubr.bf16.gmra.mrb[0].mxu0 %v959
    %v1158 = vpop.f32.mrb[0].mxu0
    %v1159 = vadd.f32 0.0, %v1158
    %v1160 = vpop.f32.mrb[0].mxu0
    %v1161 = vadd.f32 0.0, %v1160
    %v1162 = vpop.f32.mrb[0].mxu0
    %v1163 = vadd.f32 0.0, %v1162
    %v1164 = vpop.f32.mrb[0].mxu0
    %v1165 = vadd.f32 0.0, %v1164
    %1166 = vmatprep.mubr.bf16.mxu0 0
    %1167 = vmatmul.mubr.bf16.gmra.mrb[0].mxu0 %v960
    %v1168 = vpop.f32.mrb[0].mxu0
    %v1169 = vadd.f32 0.0, %v1168
    %v1170 = vpop.f32.mrb[0].mxu0
    %v1171 = vadd.f32 0.0, %v1170
    %v1172 = vpop.f32.mrb[0].mxu0
    %v1173 = vadd.f32 0.0, %v1172
    %v1174 = vpop.f32.mrb[0].mxu0
    %v1175 = vadd.f32 0.0, %v1174
    %1176 = vmatprep.mubr.bf16.mxu0 0
    %1177 = vmatmul.mubr.bf16.gmra.mrb[0].mxu0 %v961
    %v1178 = vpop.f32.mrb[0].mxu0
    %v1179 = vadd.f32 0.0, %v1178
    %v1180 = vpop.f32.mrb[0].mxu0
    %v1181 = vadd.f32 0.0, %v1180
    %v1182 = vpop.f32.mrb[0].mxu0
    %v1183 = vadd.f32 0.0, %v1182
    %v1184 = vpop.f32.mrb[0].mxu0
    %v1185 = vadd.f32 0.0, %v1184
    %1186 = vmatprep.mubr.bf16.mxu0 0
    %1187 = vmatmul.mubr.bf16.gmra.mrb[0].mxu0 %v962
    %v1188 = vpop.f32.mrb[0].mxu0
    %v1189 = vadd.f32 0.0, %v1188
    %v1190 = vpop.f32.mrb[0].mxu0
    %v1191 = vadd.f32 0.0, %v1190
    %v1192 = vpop.f32.mrb[0].mxu0
    %v1193 = vadd.f32 0.0, %v1192
    %v1194 = vpop.f32.mrb[0].mxu0
    %v1195 = vadd.f32 0.0, %v1194
    %1196 = vdwg.mxu0
    %1197 = vmatprep.subr.bf16.mxu0 0
    %1198 = vmatpush1.bf16.msra.mxu0 %v1078
    %1199 = vmatprep.subr.bf16.mxu0 0
    %1200 = vmatpush1.bf16.msra.mxu0 %v1081
    %1201 = vmatprep.subr.bf16.mxu0 0
    %1202 = vmatpush1.bf16.msra.mxu0 %v1084
    %1203 = vmatprep.subr.bf16.mxu0 0
    %1204 = vmatpush1.bf16.msra.mxu0 %v1087
    %1205 = vmatprep.subr.bf16.mxu0 0
    %1206 = vmatpush1.bf16.msra.mxu0 %v1090
    %1207 = vmatprep.subr.bf16.mxu0 0
    %1208 = vmatpush1.bf16.msra.mxu0 %v1093
    %1209 = vmatprep.subr.bf16.mxu0 0
    %1210 = vmatpush1.bf16.msra.mxu0 %v1096
    %1211 = vmatprep.subr.bf16.mxu0 0
    %1212 = vmatpush1.bf16.msra.mxu0 %v1099
    %1213 = vmatprep.subr.bf16.mxu0 0
    %1214 = vmatpush1.bf16.msra.mxu0 0
    %1215 = vmatprep.subr.bf16.mxu0 0
    %1216 = vmatpush1.bf16.msra.mxu0 0
    %1217 = vmatprep.subr.bf16.mxu0 0
    %1218 = vmatpush1.bf16.msra.mxu0 0
    %1219 = vmatprep.subr.bf16.mxu0 0
    %1220 = vmatpush1.bf16.msra.mxu0 0
    %1221 = vmatprep.subr.bf16.mxu0 0
    %1222 = vmatpush1.bf16.msra.mxu0 0
    %1223 = vmatprep.subr.bf16.mxu0 0
    %1224 = vmatpush1.bf16.msra.mxu0 0
    %1225 = vmatprep.subr.bf16.mxu0 0
    %1226 = vmatpush1.bf16.msra.mxu0 0
    %1227 = vmatprep.subr.bf16.mxu0 0
    %1228 = vmatpush1.bf16.msra.mxu0 0
    %1229 = vmatprep.mubr.bf16.mxu0 0
    %1230 = vmatmul.mubr.bf16.gmra.mrb[0].mxu0 %v959
    %v1231 = vpop.f32.mrb[0].mxu0
    %v1232 = vadd.f32 0.0, %v1231
    %v1233 = vpop.f32.mrb[0].mxu0
    %v1234 = vpop.f32.mrb[0].mxu0
    %v1235 = vadd.f32 0.0, %v1234
    %v1236 = vpop.f32.mrb[0].mxu0
    %1237 = vmatprep.mubr.bf16.mxu0 0
    %1238 = vmatmul.mubr.bf16.gmra.mrb[0].mxu0 %v960
    %v1239 = vpop.f32.mrb[0].mxu0
    %v1240 = vadd.f32 0.0, %v1239
    %v1241 = vpop.f32.mrb[0].mxu0
    %v1242 = vpop.f32.mrb[0].mxu0
    %v1243 = vadd.f32 0.0, %v1242
    %v1244 = vpop.f32.mrb[0].mxu0
    %1245 = vmatprep.mubr.bf16.mxu0 0
    %1246 = vmatmul.mubr.bf16.gmra.mrb[0].mxu0 %v961
    %v1247 = vpop.f32.mrb[0].mxu0
    %v1248 = vadd.f32 0.0, %v1247
    %v1249 = vpop.f32.mrb[0].mxu0
    %v1250 = vpop.f32.mrb[0].mxu0
    %v1251 = vadd.f32 0.0, %v1250
    %v1252 = vpop.f32.mrb[0].mxu0
    %1253 = vmatprep.mubr.bf16.mxu0 0
    %1254 = vmatmul.mubr.bf16.gmra.mrb[0].mxu0 %v962
    %v1255 = vpop.f32.mrb[0].mxu0
    %v1256 = vadd.f32 0.0, %v1255
    %v1257 = vpop.f32.mrb[0].mxu0
    %v1258 = vpop.f32.mrb[0].mxu0
    %v1259 = vadd.f32 0.0, %v1258
    %v1260 = vpop.f32.mrb[0].mxu0
    %1261 = vdwg.mxu0
    %v1262 = vrot.slane %v1159, 7
    %v1263 = vrot.slane %v1163, 7
    %v1264 = vrot.slane %v1169, 7
    %v1265 = vrot.slane %v1173, 7
    %v1266 = vrot.slane %v1179, 7
    %v1267 = vrot.slane %v1183, 7
    %v1268 = vrot.slane %v1189, 7
    %v1269 = vrot.slane %v1193, 7
    %v1270 = vsel %vm458, %v1268, %v1269
    %v1271 = vsel %vm458, %v1267, %v1268
    %v1272 = vsel %vm458, %v1266, %v1267
    %v1273 = vsel %vm458, %v1265, %v1266
    %v1274 = vsel %vm458, %v1264, %v1265
    %v1275 = vsel %vm458, %v1263, %v1264
    %v1276 = vsel %vm458, %v1262, %v1263
    %v1277 = vsel %vm458, %v1269, %v1262
    %v1278 = vsel %vm469, 0.0, %v1277
    %v1279 = vsel %vm470, 0.0, %v1276
    %v1280 = vsel %vm469, 0.0, %v1275
    %v1281 = vsel %vm470, 0.0, %v1274
    %v1282 = vsel %vm469, 0.0, %v1273
    %v1283 = vsel %vm470, 0.0, %v1272
    %v1284 = vsel %vm469, 0.0, %v1271
    %v1285 = vsel %vm470, 0.0, %v1270
    %v1286 = vadd.f32 %v1161, %v1278
    %v1287 = vadd.f32 %v1165, %v1279
    %v1288 = vadd.f32 %v1171, %v1280
    %v1289 = vadd.f32 %v1175, %v1281
    %v1290 = vadd.f32 %v1181, %v1282
    %v1291 = vadd.f32 %v1185, %v1283
    %v1292 = vadd.f32 %v1191, %v1284
    %v1293 = vadd.f32 %v1195, %v1285
    %v1294 = vrot.slane %v1232, 1
    %v1295 = vrot.slane %v1235, 1
    %v1296 = vrot.slane %v1240, 1
    %v1297 = vrot.slane %v1243, 1
    %v1298 = vrot.slane %v1248, 1
    %v1299 = vrot.slane %v1251, 1
    %v1300 = vrot.slane %v1256, 1
    %v1301 = vrot.slane %v1259, 1
    %v1302 = vsel %vm495, %v1300, %v1301
    %v1303 = vsel %vm495, %v1299, %v1300
    %v1304 = vsel %vm495, %v1298, %v1299
    %v1305 = vsel %vm495, %v1297, %v1298
    %v1306 = vsel %vm495, %v1296, %v1297
    %v1307 = vsel %vm495, %v1295, %v1296
    %v1308 = vsel %vm495, %v1294, %v1295
    %v1309 = vsel %vm495, %v1301, %v1294
    %v1310 = vsel %vm506, 0.0, %v1308
    %v1311 = vsel %vm507, 0.0, %v1307
    %v1312 = vsel %vm506, 0.0, %v1306
    %v1313 = vsel %vm507, 0.0, %v1305
    %v1314 = vsel %vm506, 0.0, %v1304
    %v1315 = vsel %vm507, 0.0, %v1303
    %v1316 = vsel %vm506, 0.0, %v1302
    %v1317 = vsel %vm507, 0.0, %v1309
    %v1318 = vadd.f32 %v1286, %v1310
    %v1319 = vadd.f32 %v1287, %v1311
    %v1320 = vadd.f32 %v1288, %v1312
    %v1321 = vadd.f32 %v1289, %v1313
    %v1322 = vadd.f32 %v1290, %v1314
    %v1323 = vadd.f32 %v1291, %v1315
    %v1324 = vadd.f32 %v1292, %v1316
    %v1325 = vadd.f32 %v1293, %v1317
    %v1326 = vld [vmem:[%s4 + $0x2] sm:$0x1]
    %v1327 = vlaneseq
    %v1328 = vshrl.u32 %v1327, 7
    %v1329 = vsub.s32 0, %v1328
    %v1330 = vrot.slane %v1326, %v1329
    %v1331 = vmul.f32 %v1318, %v1330
    %v1332 = vmul.f32 %v1319, %v1330
    %v1333 = vmul.f32 %v1320, %v1330
    %v1334 = vmul.f32 %v1321, %v1330
    %v1335 = vmul.f32 %v1322, %v1330
    %v1336 = vmul.f32 %v1323, %v1330
    %v1337 = vmul.f32 %v1324, %v1330
    %v1338 = vmul.f32 %v1325, %v1330
    %v1339 = vld [vmem:[%s5 + $0x2] sm:$0x1]
    %v1340 = vlaneseq
    %v1341 = vshrl.u32 %v1340, 7
    %v1342 = vsub.s32 0, %v1341
    %v1343 = vrot.slane %v1339, %v1342
    %v1344 = vadd.f32 %v1331, %v1343
    %v1345 = vadd.f32 %v1332, %v1343
    %v1346 = vadd.f32 %v1333, %v1343
    %v1347 = vadd.f32 %v1334, %v1343
    %v1348 = vadd.f32 %v1335, %v1343
    %v1349 = vadd.f32 %v1336, %v1343
    %v1350 = vadd.f32 %v1337, %v1343
    %v1351 = vadd.f32 %v1338, %v1343
    %v1352 = vmax.f32 %v1344, 0.0
    %v1353 = vmax.f32 %v1345, 0.0
    %v1354 = vmax.f32 %v1346, 0.0
    %v1355 = vmax.f32 %v1347, 0.0
    %v1356 = vmax.f32 %v1348, 0.0
    %v1357 = vmax.f32 %v1349, 0.0
    %v1358 = vmax.f32 %v1350, 0.0
    %v1359 = vmax.f32 %v1351, 0.0
    %1360 = vst [vmem:[#allocation5] sm:$0xff] %v1352
    %1361 = vst [vmem:[#allocation5 + $0x8] sm:$0xff] %v1353
    %1362 = vst [vmem:[#allocation5 + $0x10] sm:$0xff] %v1354
    %1363 = vst [vmem:[#allocation5 + $0x18] sm:$0xff] %v1355
    %1364 = vst [vmem:[#allocation5 + $0x20] sm:$0xff] %v1356
    %1365 = vst [vmem:[#allocation5 + $0x28] sm:$0xff] %v1357
    %1366 = vst [vmem:[#allocation5 + $0x30] sm:$0xff] %v1358
    %1367 = vst [vmem:[#allocation5 + $0x38] sm:$0xff] %v1359
    // Predicated region
    $region30: #{tpu_custom_call.1} parent=1 // pred_check
      _
    $region31: #{tpu_custom_call.1} parent=1 // pred_check_branch
      %1369 = sbr.rel (0) target = $region33
    $region32: #{tpu_custom_call.1} parent=1 // pred_region
      %s1371 = ssub.s32 1024, 1024
      %1372 = vsyncadd [#allocation4], %s1371
      %s1373 = sshll.u32 [#allocation5], 4
      %s1374 = int_to_ptr.vmem [resolvable:$true] %s1373
      %1379 = dma.vmem_to_hbm [thread:$0]  %s1374, 1024, %s6, [#allocation4], 128, 128, 8
    $region33: #{tpu_custom_call.1} parent=1 // pred_fallthru
      _
    // Predicated region
    $region34: #{tpu_custom_call.1} parent=1 // pred_check
      _
    $region35: #{tpu_custom_call.1} parent=1 // pred_check_branch
      %1381 = sbr.rel (0) target = $region37
    $region36: #{tpu_custom_call.1} parent=1 // pred_region
      %1382 = dma.done [#allocation4], 1024
    $region37: #{tpu_custom_call.1} parent=1 // pred_fallthru
      _
    %1383 = vsyncpa [#allocation3], 1
    %1384 = vsyncpa [#allocation4], 1

// kernel: tpu_custom_call.1
$region0: #{tpu_custom_call.1}
  #allocation0 [shape = 'u32[]', space=smem, size = 0x4, offset = 0x4, fixed_abs, tag = 'smem constant byte address 0x4 - core index']
  #allocation1 [shape = 'u32[144,128]{1,0:T(1,128)}', space=vmem, size = 0x12000, scoped, tag = 'internal scratch']
  %s0 = inlined_call_operand.vmem [shape: f32[4,16,4], index: 0, kind: input, shape index: {}]
  %s1 = inlined_call_operand.vmem [shape: bf16[4,128], index: 1, kind: input, shape index: {}]
  %s2 = inlined_call_operand.vmem [shape: f32[1,128], index: 2, kind: input, shape index: {}]
  %s3 = inlined_call_operand.hbm [shape: bf16[3,128,384], index: 3, kind: input, shape index: {}]
  %s4 = inlined_call_operand.vmem [shape: f32[3,128], index: 4, kind: input, shape index: {}]
  %s5 = inlined_call_operand.vmem [shape: f32[3,128], index: 5, kind: input, shape index: {}]
  %s6 = inlined_call_operand.hbm [shape: f32[4,16,128], index: 6, kind: output, shape index: {}]
  %s7 = sld [smem:[#allocation0]]
  $region38: #{tpu_custom_call.1} parent=0
    _
  %s9 = ssub.s32 1, %s7
  %s10 = scalar_select 0, %s9, %s7
  $region1: #{tpu_custom_call.1} parent=0
    #allocation2 [shape = 'u8[294912]{0}', space=vmem, size = 0x48000, scoped, tag = 'input window, operand 3, single buffered']
    #allocation3 [shape = 's32[1]{0}', space=sflag, size = 0x4, scoped, tag = 'scoped memory for tpu_custom_call.1']
    #allocation4 [shape = 's32[1]{0}', space=sflag, size = 0x4, scoped, tag = 'scoped memory for tpu_custom_call.1']
    #allocation5 [shape = 'u8[32768]{0}', space=vmem, size = 0x8000, scoped, tag = 'output window, operand 0, single buffered']
    %11 = vsyncpa [#allocation3], 0
    %12 = vsyncpa [#allocation4], 0
    // Predicated region
    $region2: #{tpu_custom_call.1} parent=1 // pred_check
      _
    $region3: #{tpu_custom_call.1} parent=1 // pred_check_branch
      %14 = sbr.rel (0) target = $region5
    $region4: #{tpu_custom_call.1} parent=1 // pred_region
      _
    $region5: #{tpu_custom_call.1} parent=1 // pred_fallthru
      _
    // Predicated region
    $region6: #{tpu_custom_call.1} parent=1 // pred_check
      _
    $region7: #{tpu_custom_call.1} parent=1 // pred_check_branch
      %16 = sbr.rel (0) target = $region9
    $region8: #{tpu_custom_call.1} parent=1 // pred_region
      _
    $region9: #{tpu_custom_call.1} parent=1 // pred_fallthru
      _
    // Predicated region
    $region10: #{tpu_custom_call.1} parent=1 // pred_check
      _
    $region11: #{tpu_custom_call.1} parent=1 // pred_check_branch
      %18 = sbr.rel (0) target = $region13
    $region12: #{tpu_custom_call.1} parent=1 // pred_region
      _
    $region13: #{tpu_custom_call.1} parent=1 // pred_fallthru
      _
    // Predicated region
    $region14: #{tpu_custom_call.1} parent=1 // pred_check
      _
    $region15: #{tpu_custom_call.1} parent=1 // pred_check_branch
      %20 = sbr.rel (0) target = $region17
    $region16: #{tpu_custom_call.1} parent=1 // pred_region
      %s22 = ssub.s32 9216, 9216
      %23 = vsyncadd [#allocation3], %s22
      %s24 = sshll.u32 [#allocation2], 4
      %s25 = int_to_ptr.vmem [resolvable:$true] %s24
      %30 = dma.hbm_to_vmem [thread:$0]  %s3, 9216, %s25, [#allocation3], 192, 192, 12
    $region17: #{tpu_custom_call.1} parent=1 // pred_fallthru
      _
    // Predicated region
    $region18: #{tpu_custom_call.1} parent=1 // pred_check
      _
    $region19: #{tpu_custom_call.1} parent=1 // pred_check_branch
      %32 = sbr.rel (0) target = $region21
    $region20: #{tpu_custom_call.1} parent=1 // pred_region
      _
    $region21: #{tpu_custom_call.1} parent=1 // pred_fallthru
      _
    // Predicated region
    $region22: #{tpu_custom_call.1} parent=1 // pred_check
      _
    $region23: #{tpu_custom_call.1} parent=1 // pred_check_branch
      %34 = sbr.rel (0) target = $region25
    $region24: #{tpu_custom_call.1} parent=1 // pred_region
      _
    $region25: #{tpu_custom_call.1} parent=1 // pred_fallthru
      _
    // Predicated region
    $region26: #{tpu_custom_call.1} parent=1 // pred_check
      _
    $region27: #{tpu_custom_call.1} parent=1 // pred_check_branch
      %36 = sbr.rel (0) target = $region29
    $region28: #{tpu_custom_call.1} parent=1 // pred_region
      %37 = dma.done [#allocation3], 9216
    $region29: #{tpu_custom_call.1} parent=1 // pred_fallthru
      _
    %v39 = vld [vmem:[%s0] sm:$0xff]
    %v40 = vld [vmem:[%s0 + $0x8] sm:$0xff]
    %v41 = vld [vmem:[%s0 + $0x10] sm:$0xff]
    %v42 = vld [vmem:[%s0 + $0x18] sm:$0xff]
    %v43 = vld [vmem:[%s0 + $0x20] sm:$0xff]
    %v44 = vld [vmem:[%s0 + $0x28] sm:$0xff]
    %v45 = vld [vmem:[%s0 + $0x30] sm:$0xff]
    %v46 = vld [vmem:[%s0 + $0x38] sm:$0xff]
    %v47 = vpack.c.bf16 %v40, %v39
    %v48 = vpack.c.bf16 %v42, %v41
    %v49 = vpack.c.bf16 %v44, %v43
    %v50 = vpack.c.bf16 %v46, %v45
    %v51 = vld [vmem:[%s1] sm:$0x3]
    %v52 = vld [vmem:[%s2] sm:$0x1]
    %v54 = vlaneseq
    %v55 = vshrl.u32 %v54, 7
    %v56 = vsub.s32 0, %v55
    %v57 = vrot.slane %v52, %v56
    %vm59 = vcmask 31744
    %v61 = vsel %vm59, %v47, 0
    %v64 = vsel %vm59, %v48, 0
    %v67 = vsel %vm59, %v49, 0
    %v70 = vsel %vm59, %v50, 0
    %vm72 = vcmask 1041408
    %v74 = vsel %vm72, %v51, 0
    %76 = vmatprep.subr.bf16.mxu0 0
    %77 = vmatpush1.bf16.msra.mxu0 %v74
    %78 = vmatprep.subr.bf16.mxu0 0
    %79 = vmatpush1.bf16.msra.mxu0 0
    %80 = vmatprep.subr.bf16.mxu0 0
    %81 = vmatpush1.bf16.msra.mxu0 0
    %82 = vmatprep.subr.bf16.mxu0 0
    %83 = vmatpush1.bf16.msra.mxu0 0
    %84 = vmatprep.subr.bf16.mxu0 0
    %85 = vmatpush1.bf16.msra.mxu0 0
    %86 = vmatprep.subr.bf16.mxu0 0
    %87 = vmatpush1.bf16.msra.mxu0 0
    %88 = vmatprep.subr.bf16.mxu0 0
    %89 = vmatpush1.bf16.msra.mxu0 0
    %90 = vmatprep.subr.bf16.mxu0 0
    %91 = vmatpush1.bf16.msra.mxu0 0
    %92 = vmatprep.subr.bf16.mxu0 0
    %93 = vmatpush1.bf16.msra.mxu0 0
    %94 = vmatprep.subr.bf16.mxu0 0
    %95 = vmatpush1.bf16.msra.mxu0 0
    %96 = vmatprep.subr.bf16.mxu0 0
    %97 = vmatpush1.bf16.msra.mxu0 0
    %98 = vmatprep.subr.bf16.mxu0 0
    %99 = vmatpush1.bf16.msra.mxu0 0
    %100 = vmatprep.subr.bf16.mxu0 0
    %101 = vmatpush1.bf16.msra.mxu0 0
    %102 = vmatprep.subr.bf16.mxu0 0
    %103 = vmatpush1.bf16.msra.mxu0 0
    %104 = vmatprep.subr.bf16.mxu0 0
    %105 = vmatpush1.bf16.msra.mxu0 0
    %106 = vmatprep.subr.bf16.mxu0 0
    %107 = vmatpush1.bf16.msra.mxu0 0
    %108 = vmatprep.mubr.bf16.mxu0 0
    %109 = vmatmul.mubr.bf16.gmra.mrb[0].mxu0 %v61
    %v110 = vpop.f32.mrb[0].mxu0
    %v111 = vadd.f32 %v57, %v110
    %v112 = vpop.f32.mrb[0].mxu0
    %v113 = vpop.f32.mrb[0].mxu0
    %v114 = vadd.f32 %v57, %v113
    %v115 = vpop.f32.mrb[0].mxu0
    %116 = vmatprep.mubr.bf16.mxu0 0
    %117 = vmatmul.mubr.bf16.gmra.mrb[0].mxu0 %v64
    %v118 = vpop.f32.mrb[0].mxu0
    %v119 = vadd.f32 %v57, %v118
    %v120 = vpop.f32.mrb[0].mxu0
    %v121 = vpop.f32.mrb[0].mxu0
    %v122 = vadd.f32 %v57, %v121
    %v123 = vpop.f32.mrb[0].mxu0
    %124 = vmatprep.mubr.bf16.mxu0 0
    %125 = vmatmul.mubr.bf16.gmra.mrb[0].mxu0 %v67
    %v126 = vpop.f32.mrb[0].mxu0
    %v127 = vadd.f32 %v57, %v126
    %v128 = vpop.f32.mrb[0].mxu0
    %v129 = vpop.f32.mrb[0].mxu0
    %v130 = vadd.f32 %v57, %v129
    %v131 = vpop.f32.mrb[0].mxu0
    %132 = vmatprep.mubr.bf16.mxu0 0
    %133 = vmatmul.mubr.bf16.gmra.mrb[0].mxu0 %v70
    %v134 = vpop.f32.mrb[0].mxu0
    %v135 = vadd.f32 %v57, %v134
    %v136 = vpop.f32.mrb[0].mxu0
    %v137 = vpop.f32.mrb[0].mxu0
    %v138 = vadd.f32 %v57, %v137
    %v139 = vpop.f32.mrb[0].mxu0
    %140 = vdwg.mxu0
    %v141 = vlaneseq
    %v142 = vshrl.u32 %v141, 7
    %v143 = vadd.s32 %v142, 8
    %vm144 = vcmp.eq.s32.totalorder %v142, 0
    %vm145 = vcmp.eq.s32.totalorder %v143, 0
    %vm146 = vcmp.eq.s32.totalorder %v142, 15
    %vm147 = vcmp.eq.s32.totalorder %v143, 15
    %v148 = vpack.c.bf16 %v114, %v111
    %v149 = vpack.c.bf16 %v122, %v119
    %v150 = vpack.c.bf16 %v130, %v127
    %v151 = vpack.c.bf16 %v138, %v135
    %v152 = vld [vmem:[#allocation2] sm:$0xff]
    %v153 = vld [vmem:[#allocation2 + $0x8] sm:$0xf]
    %v154 = vld [vmem:[#allocation2 + $0xc] sm:$0xff]
    %v155 = vld [vmem:[#allocation2 + $0x14] sm:$0xf]
    %v156 = vld [vmem:[#allocation2 + $0x18] sm:$0xff]
    %v157 = vld [vmem:[#allocation2 + $0x20] sm:$0xf]
    %v158 = vld [vmem:[#allocation2 + $0x24] sm:$0xff]
    %v159 = vld [vmem:[#allocation2 + $0x2c] sm:$0xf]
    %v160 = vld [vmem:[#allocation2 + $0x30] sm:$0xff]
    %v161 = vld [vmem:[#allocation2 + $0x38] sm:$0xf]
    %v162 = vld [vmem:[#allocation2 + $0x3c] sm:$0xff]
    %v163 = vld [vmem:[#allocation2 + $0x44] sm:$0xf]
    %v164 = vld [vmem:[#allocation2 + $0x48] sm:$0xff]
    %v165 = vld [vmem:[#allocation2 + $0x50] sm:$0xf]
    %v166 = vld [vmem:[#allocation2 + $0x54] sm:$0xff]
    %v167 = vld [vmem:[#allocation2 + $0x5c] sm:$0xf]
    %v168 = vld [vmem:[#allocation2 + $0x60] sm:$0xff]
    %v169 = vld [vmem:[#allocation2 + $0x68] sm:$0xf]
    %v170 = vld [vmem:[#allocation2 + $0x6c] sm:$0xff]
    %v171 = vld [vmem:[#allocation2 + $0x74] sm:$0xf]
    %v172 = vld [vmem:[#allocation2 + $0x78] sm:$0xff]
    %v173 = vld [vmem:[#allocation2 + $0x80] sm:$0xf]
    %v174 = vld [vmem:[#allocation2 + $0x84] sm:$0xff]
    %v175 = vld [vmem:[#allocation2 + $0x8c] sm:$0xf]
    %v176 = vld [vmem:[#allocation2 + $0x90] sm:$0xff]
    %v177 = vld [vmem:[#allocation2 + $0x98] sm:$0xf]
    %v178 = vld [vmem:[#allocation2 + $0x9c] sm:$0xff]
    %v179 = vld [vmem:[#allocation2 + $0xa4] sm:$0xf]
    %v180 = vld [vmem:[#allocation2 + $0xa8] sm:$0xff]
    %v181 = vld [vmem:[#allocation2 + $0xb0] sm:$0xf]
    %v182 = vld [vmem:[#allocation2 + $0xb4] sm:$0xff]
    %v183 = vld [vmem:[#allocation2 + $0xbc] sm:$0xf]
    %v216 = vunpack.c.l.b16 %v152
    %v217 = vunpack.c.h.b16 %v152
    %v218 = vunpack.c.l.b16 %v153
    %v219 = vunpack.c.l.b16 %v154
    %v220 = vunpack.c.h.b16 %v154
    %v221 = vunpack.c.l.b16 %v155
    %v222 = vunpack.c.l.b16 %v156
    %v223 = vunpack.c.h.b16 %v156
    %v224 = vunpack.c.l.b16 %v157
    %v225 = vunpack.c.l.b16 %v158
    %v226 = vunpack.c.h.b16 %v158
    %v227 = vunpack.c.l.b16 %v159
    %v228 = vunpack.c.l.b16 %v160
    %v229 = vunpack.c.h.b16 %v160
    %v230 = vunpack.c.l.b16 %v161
    %v231 = vunpack.c.l.b16 %v162
    %v232 = vunpack.c.h.b16 %v162
    %v233 = vunpack.c.l.b16 %v163
    %v234 = vunpack.c.l.b16 %v164
    %v235 = vunpack.c.h.b16 %v164
    %v236 = vunpack.c.l.b16 %v165
    %v237 = vunpack.c.l.b16 %v166
    %v238 = vunpack.c.h.b16 %v166
    %v239 = vunpack.c.l.b16 %v167
    %v240 = vunpack.c.l.b16 %v168
    %v241 = vunpack.c.h.b16 %v168
    %v242 = vunpack.c.l.b16 %v169
    %v243 = vunpack.c.l.b16 %v170
    %v244 = vunpack.c.h.b16 %v170
    %v245 = vunpack.c.l.b16 %v171
    %v246 = vunpack.c.l.b16 %v172
    %v247 = vunpack.c.h.b16 %v172
    %v248 = vunpack.c.l.b16 %v173
    %v249 = vunpack.c.l.b16 %v174
    %v250 = vunpack.c.h.b16 %v174
    %v251 = vunpack.c.l.b16 %v175
    %v252 = vunpack.c.l.b16 %v176
    %v253 = vunpack.c.h.b16 %v176
    %v254 = vunpack.c.l.b16 %v177
    %v255 = vunpack.c.l.b16 %v178
    %v256 = vunpack.c.h.b16 %v178
    %v257 = vunpack.c.l.b16 %v179
    %v258 = vunpack.c.l.b16 %v180
    %v259 = vunpack.c.h.b16 %v180
    %v260 = vunpack.c.l.b16 %v181
    %v261 = vunpack.c.l.b16 %v182
    %v262 = vunpack.c.h.b16 %v182
    %v263 = vunpack.c.l.b16 %v183
    %v264 = vpack.c.b16 %v219, %v216
    %v265 = vpack.c.b16 %v220, %v217
    %v266 = vpack.c.b16 %v221, %v218
    %v267 = vpack.c.b16 %v225, %v222
    %v268 = vpack.c.b16 %v226, %v223
    %v269 = vpack.c.b16 %v227, %v224
    %v270 = vpack.c.b16 %v231, %v228
    %v271 = vpack.c.b16 %v232, %v229
    %v272 = vpack.c.b16 %v233, %v230
    %v273 = vpack.c.b16 %v237, %v234
    %v274 = vpack.c.b16 %v238, %v235
    %v275 = vpack.c.b16 %v239, %v236
    %v276 = vpack.c.b16 %v243, %v240
    %v277 = vpack.c.b16 %v244, %v241
    %v278 = vpack.c.b16 %v245, %v242
    %v279 = vpack.c.b16 %v249, %v246
    %v280 = vpack.c.b16 %v250, %v247
    %v281 = vpack.c.b16 %v251, %v248
    %v282 = vpack.c.b16 %v255, %v252
    %v283 = vpack.c.b16 %v256, %v253
    %v284 = vpack.c.b16 %v257, %v254
    %v285 = vpack.c.b16 %v261, %v258
    %v286 = vpack.c.b16 %v262, %v259
    %v287 = vpack.c.b16 %v263, %v260
    %312 = vmatprep.subr.bf16.mxu0 %v265
    %313 = vmatpush1.bf16.msra.mxu0 %v264
    %314 = vmatprep.subr.bf16.mxu0 %v268
    %315 = vmatpush1.bf16.msra.mxu0 %v267
    %316 = vmatprep.subr.bf16.mxu0 %v271
    %317 = vmatpush1.bf16.msra.mxu0 %v270
    %318 = vmatprep.subr.bf16.mxu0 %v274
    %319 = vmatpush1.bf16.msra.mxu0 %v273
    %320 = vmatprep.subr.bf16.mxu0 %v277
    %321 = vmatpush1.bf16.msra.mxu0 %v276
    %322 = vmatprep.subr.bf16.mxu0 %v280
    %323 = vmatpush1.bf16.msra.mxu0 %v279
    %324 = vmatprep.subr.bf16.mxu0 %v283
    %325 = vmatpush1.bf16.msra.mxu0 %v282
    %326 = vmatprep.subr.bf16.mxu0 %v286
    %327 = vmatpush1.bf16.msra.mxu0 %v285
    %328 = vmatprep.subr.bf16.mxu0 0
    %329 = vmatpush1.bf16.msra.mxu0 0
    %330 = vmatprep.subr.bf16.mxu0 0
    %331 = vmatpush1.bf16.msra.mxu0 0
    %332 = vmatprep.subr.bf16.mxu0 0
    %333 = vmatpush1.bf16.msra.mxu0 0
    %334 = vmatprep.subr.bf16.mxu0 0
    %335 = vmatpush1.bf16.msra.mxu0 0
    %336 = vmatprep.subr.bf16.mxu0 0
    %337 = vmatpush1.bf16.msra.mxu0 0
    %338 = vmatprep.subr.bf16.mxu0 0
    %339 = vmatpush1.bf16.msra.mxu0 0
    %340 = vmatprep.subr.bf16.mxu0 0
    %341 = vmatpush1.bf16.msra.mxu0 0
    %342 = vmatprep.subr.bf16.mxu0 0
    %343 = vmatpush1.bf16.msra.mxu0 0
    %344 = vmatprep.mubr.bf16.mxu0 0
    %345 = vmatmul.mubr.bf16.gmra.mrb[0].mxu0 %v148
    %v346 = vpop.f32.mrb[0].mxu0
    %v347 = vadd.f32 0.0, %v346
    %v348 = vpop.f32.mrb[0].mxu0
    %v349 = vadd.f32 0.0, %v348
    %v350 = vpop.f32.mrb[0].mxu0
    %v351 = vadd.f32 0.0, %v350
    %v352 = vpop.f32.mrb[0].mxu0
    %v353 = vadd.f32 0.0, %v352
    %354 = vmatprep.mubr.bf16.mxu0 0
    %355 = vmatmul.mubr.bf16.gmra.mrb[0].mxu0 %v149
    %v356 = vpop.f32.mrb[0].mxu0
    %v357 = vadd.f32 0.0, %v356
    %v358 = vpop.f32.mrb[0].mxu0
    %v359 = vadd.f32 0.0, %v358
    %v360 = vpop.f32.mrb[0].mxu0
    %v361 = vadd.f32 0.0, %v360
    %v362 = vpop.f32.mrb[0].mxu0
    %v363 = vadd.f32 0.0, %v362
    %364 = vmatprep.mubr.bf16.mxu0 0
    %365 = vmatmul.mubr.bf16.gmra.mrb[0].mxu0 %v150
    %v366 = vpop.f32.mrb[0].mxu0
    %v367 = vadd.f32 0.0, %v366
    %v368 = vpop.f32.mrb[0].mxu0
    %v369 = vadd.f32 0.0, %v368
    %v370 = vpop.f32.mrb[0].mxu0
    %v371 = vadd.f32 0.0, %v370
    %v372 = vpop.f32.mrb[0].mxu0
    %v373 = vadd.f32 0.0, %v372
    %374 = vmatprep.mubr.bf16.mxu0 0
    %375 = vmatmul.mubr.bf16.gmra.mrb[0].mxu0 %v151
    %v376 = vpop.f32.mrb[0].mxu0
    %v377 = vadd.f32 0.0, %v376
    %v378 = vpop.f32.mrb[0].mxu0
    %v379 = vadd.f32 0.0, %v378
    %v380 = vpop.f32.mrb[0].mxu0
    %v381 = vadd.f32 0.0, %v380
    %v382 = vpop.f32.mrb[0].mxu0
    %v383 = vadd.f32 0.0, %v382
    %384 = vdwg.mxu0
    %385 = vmatprep.subr.bf16.mxu0 0
    %386 = vmatpush1.bf16.msra.mxu0 %v266
    %387 = vmatprep.subr.bf16.mxu0 0
    %388 = vmatpush1.bf16.msra.mxu0 %v269
    %389 = vmatprep.subr.bf16.mxu0 0
    %390 = vmatpush1.bf16.msra.mxu0 %v272
    %391 = vmatprep.subr.bf16.mxu0 0
    %392 = vmatpush1.bf16.msra.mxu0 %v275
    %393 = vmatprep.subr.bf16.mxu0 0
    %394 = vmatpush1.bf16.msra.mxu0 %v278
    %395 = vmatprep.subr.bf16.mxu0 0
    %396 = vmatpush1.bf16.msra.mxu0 %v281
    %397 = vmatprep.subr.bf16.mxu0 0
    %398 = vmatpush1.bf16.msra.mxu0 %v284
    %399 = vmatprep.subr.bf16.mxu0 0
    %400 = vmatpush1.bf16.msra.mxu0 %v287
    %401 = vmatprep.subr.bf16.mxu0 0
    %402 = vmatpush1.bf16.msra.mxu0 0
    %403 = vmatprep.subr.bf16.mxu0 0
    %404 = vmatpush1.bf16.msra.mxu0 0
    %405 = vmatprep.subr.bf16.mxu0 0
    %406 = vmatpush1.bf16.msra.mxu0 0
    %407 = vmatprep.subr.bf16.mxu0 0
    %408 = vmatpush1.bf16.msra.mxu0 0
    %409 = vmatprep.subr.bf16.mxu0 0
    %410 = vmatpush1.bf16.msra.mxu0 0
    %411 = vmatprep.subr.bf16.mxu0 0
    %412 = vmatpush1.bf16.msra.mxu0 0
    %413 = vmatprep.subr.bf16.mxu0 0
    %414 = vmatpush1.bf16.msra.mxu0 0
    %415 = vmatprep.subr.bf16.mxu0 0
    %416 = vmatpush1.bf16.msra.mxu0 0
    %417 = vmatprep.mubr.bf16.mxu0 0
    %418 = vmatmul.mubr.bf16.gmra.mrb[0].mxu0 %v148
    %v419 = vpop.f32.mrb[0].mxu0
    %v420 = vadd.f32 0.0, %v419
    %v421 = vpop.f32.mrb[0].mxu0
    %v422 = vpop.f32.mrb[0].mxu0
    %v423 = vadd.f32 0.0, %v422
    %v424 = vpop.f32.mrb[0].mxu0
    %425 = vmatprep.mubr.bf16.mxu0 0
    %426 = vmatmul.mubr.bf16.gmra.mrb[0].mxu0 %v149
    %v427 = vpop.f32.mrb[0].mxu0
    %v428 = vadd.f32 0.0, %v427
    %v429 = vpop.f32.mrb[0].mxu0
    %v430 = vpop.f32.mrb[0].mxu0
    %v431 = vadd.f32 0.0, %v430
    %v432 = vpop.f32.mrb[0].mxu0
    %433 = vmatprep.mubr.bf16.mxu0 0
    %434 = vmatmul.mubr.bf16.gmra.mrb[0].mxu0 %v150
    %v435 = vpop.f32.mrb[0].mxu0
    %v436 = vadd.f32 0.0, %v435
    %v437 = vpop.f32.mrb[0].mxu0
    %v438 = vpop.f32.mrb[0].mxu0
    %v439 = vadd.f32 0.0, %v438
    %v440 = vpop.f32.mrb[0].mxu0
    %441 = vmatprep.mubr.bf16.mxu0 0
    %442 = vmatmul.mubr.bf16.gmra.mrb[0].mxu0 %v151
    %v443 = vpop.f32.mrb[0].mxu0
    %v444 = vadd.f32 0.0, %v443
    %v445 = vpop.f32.mrb[0].mxu0
    %v446 = vpop.f32.mrb[0].mxu0
    %v447 = vadd.f32 0.0, %v446
    %v448 = vpop.f32.mrb[0].mxu0
    %449 = vdwg.mxu0
    %v450 = vrot.slane %v347, 7
    %v451 = vrot.slane %v351, 7
    %v452 = vrot.slane %v357, 7
    %v453 = vrot.slane %v361, 7
    %v454 = vrot.slane %v367, 7
    %v455 = vrot.slane %v371, 7
    %v456 = vrot.slane %v377, 7
    %v457 = vrot.slane %v381, 7
    %vm458 = vcmp.lt.s32.totalorder %v142, 1
    %v459 = vsel %vm458, %v456, %v457
    %v460 = vsel %vm458, %v455, %v456
    %v461 = vsel %vm458, %v454, %v455
    %v462 = vsel %vm458, %v453, %v454
    %v463 = vsel %vm458, %v452, %v453
    %v464 = vsel %vm458, %v451, %v452
    %v465 = vsel %vm458, %v450, %v451
    %v466 = vsel %vm458, %v457, %v450
    %v467 = vsel %vm144, 1, 0
    %v468 = vsel %vm145, 1, 0
    %vm469 = vcmp.eq.s32.totalorder %v467, 1
    %vm470 = vcmp.eq.s32.totalorder %v468, 1
    %v471 = vsel %vm469, 0.0, %v466
    %v472 = vsel %vm470, 0.0, %v465
    %v473 = vsel %vm469, 0.0, %v464
    %v474 = vsel %vm470, 0.0, %v463
    %v475 = vsel %vm469, 0.0, %v462
    %v476 = vsel %vm470, 0.0, %v461
    %v477 = vsel %vm469, 0.0, %v460
    %v478 = vsel %vm470, 0.0, %v459
    %v479 = vadd.f32 %v349, %v471
    %v480 = vadd.f32 %v353, %v472
    %v481 = vadd.f32 %v359, %v473
    %v482 = vadd.f32 %v363, %v474
    %v483 = vadd.f32 %v369, %v475
    %v484 = vadd.f32 %v373, %v476
    %v485 = vadd.f32 %v379, %v477
    %v486 = vadd.f32 %v383, %v478
    %v487 = vrot.slane %v420, 1
    %v488 = vrot.slane %v423, 1
    %v489 = vrot.slane %v428, 1
    %v490 = vrot.slane %v431, 1
    %v491 = vrot.slane %v436, 1
    %v492 = vrot.slane %v439, 1
    %v493 = vrot.slane %v444, 1
    %v494 = vrot.slane %v447, 1
    %vm495 = vcmp.lt.s32.totalorder %v142, 7
    %v496 = vsel %vm495, %v493, %v494
    %v497 = vsel %vm495, %v492, %v493
    %v498 = vsel %vm495, %v491, %v492
    %v499 = vsel %vm495, %v490, %v491
    %v500 = vsel %vm495, %v489, %v490
    %v501 = vsel %vm495, %v488, %v489
    %v502 = vsel %vm495, %v487, %v488
    %v503 = vsel %vm495, %v494, %v487
    %v504 = vsel %vm146, 1, 0
    %v505 = vsel %vm147, 1, 0
    %vm506 = vcmp.eq.s32.totalorder %v504, 1
    %vm507 = vcmp.eq.s32.totalorder %v505, 1
    %v508 = vsel %vm506, 0.0, %v502
    %v509 = vsel %vm507, 0.0, %v501
    %v510 = vsel %vm506, 0.0, %v500
    %v511 = vsel %vm507, 0.0, %v499
    %v512 = vsel %vm506, 0.0, %v498
    %v513 = vsel %vm507, 0.0, %v497
    %v514 = vsel %vm506, 0.0, %v496
    %v515 = vsel %vm507, 0.0, %v503
    %v516 = vadd.f32 %v479, %v508
    %v517 = vadd.f32 %v480, %v509
    %v518 = vadd.f32 %v481, %v510
    %v519 = vadd.f32 %v482, %v511
    %v520 = vadd.f32 %v483, %v512
    %v521 = vadd.f32 %v484, %v513
    %v522 = vadd.f32 %v485, %v514
    %v523 = vadd.f32 %v486, %v515
    %v524 = vld [vmem:[%s4] sm:$0x1]
    %v525 = vlaneseq
    %v526 = vshrl.u32 %v525, 7
    %v527 = vsub.s32 0, %v526
    %v528 = vrot.slane %v524, %v527
    %v529 = vmul.f32 %v516, %v528
    %v530 = vmul.f32 %v517, %v528
    %v531 = vmul.f32 %v518, %v528
    %v532 = vmul.f32 %v519, %v528
    %v533 = vmul.f32 %v520, %v528
    %v534 = vmul.f32 %v521, %v528
    %v535 = vmul.f32 %v522, %v528
    %v536 = vmul.f32 %v523, %v528
    %v537 = vld [vmem:[%s5] sm:$0x1]
    %v538 = vlaneseq
    %v539 = vshrl.u32 %v538, 7
    %v540 = vsub.s32 0, %v539
    %v541 = vrot.slane %v537, %v540
    %v542 = vadd.f32 %v529, %v541
    %v543 = vadd.f32 %v530, %v541
    %v544 = vadd.f32 %v531, %v541
    %v545 = vadd.f32 %v532, %v541
    %v546 = vadd.f32 %v533, %v541
    %v547 = vadd.f32 %v534, %v541
    %v548 = vadd.f32 %v535, %v541
    %v549 = vadd.f32 %v536, %v541
    %v550 = vmax.f32 %v542, 0.0
    %v551 = vmax.f32 %v543, 0.0
    %v552 = vmax.f32 %v544, 0.0
    %v553 = vmax.f32 %v545, 0.0
    %v554 = vmax.f32 %v546, 0.0
    %v555 = vmax.f32 %v547, 0.0
    %v556 = vmax.f32 %v548, 0.0
    %v557 = vmax.f32 %v549, 0.0
    %v558 = vpack.c.bf16 %v551, %v550
    %v559 = vpack.c.bf16 %v553, %v552
    %v560 = vpack.c.bf16 %v555, %v554
    %v561 = vpack.c.bf16 %v557, %v556
    %s562 = scalar_lea.vmem [#allocation2], 192
    %v563 = vld [vmem:[%s562] sm:$0xff]
    %v564 = vld [vmem:[%s562 + $0x8] sm:$0xf]
    %v565 = vld [vmem:[%s562 + $0xc] sm:$0xff]
    %v566 = vld [vmem:[%s562 + $0x14] sm:$0xf]
    %v567 = vld [vmem:[%s562 + $0x18] sm:$0xff]
    %v568 = vld [vmem:[%s562 + $0x20] sm:$0xf]
    %v569 = vld [vmem:[%s562 + $0x24] sm:$0xff]
    %v570 = vld [vmem:[%s562 + $0x2c] sm:$0xf]
    %v571 = vld [vmem:[%s562 + $0x30] sm:$0xff]
    %v572 = vld [vmem:[%s562 + $0x38] sm:$0xf]
    %v573 = vld [vmem:[%s562 + $0x3c] sm:$0xff]
    %v574 = vld [vmem:[%s562 + $0x44] sm:$0xf]
    %v575 = vld [vmem:[%s562 + $0x48] sm:$0xff]
    %v576 = vld [vmem:[%s562 + $0x50] sm:$0xf]
    %v577 = vld [vmem:[%s562 + $0x54] sm:$0xff]
    %v578 = vld [vmem:[%s562 + $0x5c] sm:$0xf]
    %v579 = vld [vmem:[%s562 + $0x60] sm:$0xff]
    %v580 = vld [vmem:[%s562 + $0x68] sm:$0xf]
    %v581 = vld [vmem:[%s562 + $0x6c] sm:$0xff]
    %v582 = vld [vmem:[%s562 + $0x74] sm:$0xf]
    %v583 = vld [vmem:[%s562 + $0x78] sm:$0xff]
    %v584 = vld [vmem:[%s562 + $0x80] sm:$0xf]
    %v585 = vld [vmem:[%s562 + $0x84] sm:$0xff]
    %v586 = vld [vmem:[%s562 + $0x8c] sm:$0xf]
    %v587 = vld [vmem:[%s562 + $0x90] sm:$0xff]
    %v588 = vld [vmem:[%s562 + $0x98] sm:$0xf]
    %v589 = vld [vmem:[%s562 + $0x9c] sm:$0xff]
    %v590 = vld [vmem:[%s562 + $0xa4] sm:$0xf]
    %v591 = vld [vmem:[%s562 + $0xa8] sm:$0xff]
    %v592 = vld [vmem:[%s562 + $0xb0] sm:$0xf]
    %v593 = vld [vmem:[%s562 + $0xb4] sm:$0xff]
    %v594 = vld [vmem:[%s562 + $0xbc] sm:$0xf]
    %v627 = vunpack.c.l.b16 %v563
    %v628 = vunpack.c.h.b16 %v563
    %v629 = vunpack.c.l.b16 %v564
    %v630 = vunpack.c.l.b16 %v565
    %v631 = vunpack.c.h.b16 %v565
    %v632 = vunpack.c.l.b16 %v566
    %v633 = vunpack.c.l.b16 %v567
    %v634 = vunpack.c.h.b16 %v567
    %v635 = vunpack.c.l.b16 %v568
    %v636 = vunpack.c.l.b16 %v569
    %v637 = vunpack.c.h.b16 %v569
    %v638 = vunpack.c.l.b16 %v570
    %v639 = vunpack.c.l.b16 %v571
    %v640 = vunpack.c.h.b16 %v571
    %v641 = vunpack.c.l.b16 %v572
    %v642 = vunpack.c.l.b16 %v573
    %v643 = vunpack.c.h.b16 %v573
    %v644 = vunpack.c.l.b16 %v574
    %v645 = vunpack.c.l.b16 %v575
    %v646 = vunpack.c.h.b16 %v575
    %v647 = vunpack.c.l.b16 %v576
    %v648 = vunpack.c.l.b16 %v577
    %v649 = vunpack.c.h.b16 %v577
    %v650 = vunpack.c.l.b16 %v578
    %v651 = vunpack.c.l.b16 %v579
    %v652 = vunpack.c.h.b16 %v579
    %v653 = vunpack.c.l.b16 %v580
    %v654 = vunpack.c.l.b16 %v581
    %v655 = vunpack.c.h.b16 %v581
    %v656 = vunpack.c.l.b16 %v582
    %v657 = vunpack.c.l.b16 %v583
    %v658 = vunpack.c.h.b16 %v583
    %v659 = vunpack.c.l.b16 %v584
    %v660 = vunpack.c.l.b16 %v585
    %v661 = vunpack.c.h.b16 %v585
    %v662 = vunpack.c.l.b16 %v586
    %v663 = vunpack.c.l.b16 %v587
    %v664 = vunpack.c.h.b16 %v587
    %v665 = vunpack.c.l.b16 %v588
    %v666 = vunpack.c.l.b16 %v589
    %v667 = vunpack.c.h.b16 %v589
    %v668 = vunpack.c.l.b16 %v590
    %v669 = vunpack.c.l.b16 %v591
    %v670 = vunpack.c.h.b16 %v591
    %v671 = vunpack.c.l.b16 %v592
    %v672 = vunpack.c.l.b16 %v593
    %v673 = vunpack.c.h.b16 %v593
    %v674 = vunpack.c.l.b16 %v594
    %v675 = vpack.c.b16 %v630, %v627
    %v676 = vpack.c.b16 %v631, %v628
    %v677 = vpack.c.b16 %v632, %v629
    %v678 = vpack.c.b16 %v636, %v633
    %v679 = vpack.c.b16 %v637, %v634
    %v680 = vpack.c.b16 %v638, %v635
    %v681 = vpack.c.b16 %v642, %v639
    %v682 = vpack.c.b16 %v643, %v640
    %v683 = vpack.c.b16 %v644, %v641
    %v684 = vpack.c.b16 %v648, %v645
    %v685 = vpack.c.b16 %v649, %v646
    %v686 = vpack.c.b16 %v650, %v647
    %v687 = vpack.c.b16 %v654, %v651
    %v688 = vpack.c.b16 %v655, %v652
    %v689 = vpack.c.b16 %v656, %v653
    %v690 = vpack.c.b16 %v660, %v657
    %v691 = vpack.c.b16 %v661, %v658
    %v692 = vpack.c.b16 %v662, %v659
    %v693 = vpack.c.b16 %v666, %v663
    %v694 = vpack.c.b16 %v667, %v664
    %v695 = vpack.c.b16 %v668, %v665
    %v696 = vpack.c.b16 %v672, %v669
    %v697 = vpack.c.b16 %v673, %v670
    %v698 = vpack.c.b16 %v674, %v671
    %723 = vmatprep.subr.bf16.mxu0 %v676
    %724 = vmatpush1.bf16.msra.mxu0 %v675
    %725 = vmatprep.subr.bf16.mxu0 %v679
    %726 = vmatpush1.bf16.msra.mxu0 %v678
    %727 = vmatprep.subr.bf16.mxu0 %v682
    %728 = vmatpush1.bf16.msra.mxu0 %v681
    %729 = vmatprep.subr.bf16.mxu0 %v685
    %730 = vmatpush1.bf16.msra.mxu0 %v684
    %731 = vmatprep.subr.bf16.mxu0 %v688
    %732 = vmatpush1.bf16.msra.mxu0 %v687
    %733 = vmatprep.subr.bf16.mxu0 %v691
    %734 = vmatpush1.bf16.msra.mxu0 %v690
    %735 = vmatprep.subr.bf16.mxu0 %v694
    %736 = vmatpush1.bf16.msra.mxu0 %v693
    %737 = vmatprep.subr.bf16.mxu0 %v697
    %738 = vmatpush1.bf16.msra.mxu0 %v696
    %739 = vmatprep.subr.bf16.mxu0 0
    %740 = vmatpush1.bf16.msra.mxu0 0
    %741 = vmatprep.subr.bf16.mxu0 0
    %742 = vmatpush1.bf16.msra.mxu0 0
    %743 = vmatprep.subr.bf16.mxu0 0
    %744 = vmatpush1.bf16.msra.mxu0 0
    %745 = vmatprep.subr.bf16.mxu0 0
    %746 = vmatpush1.bf16.msra.mxu0 0
    %747 = vmatprep.subr.bf16.mxu0 0
    %748 = vmatpush1.bf16.msra.mxu0 0
    %749 = vmatprep.subr.bf16.mxu0 0
    %750 = vmatpush1.bf16.msra.mxu0 0
    %751 = vmatprep.subr.bf16.mxu0 0
    %752 = vmatpush1.bf16.msra.mxu0 0
    %753 = vmatprep.subr.bf16.mxu0 0
    %754 = vmatpush1.bf16.msra.mxu0 0
    %755 = vmatprep.mubr.bf16.mxu0 0
    %756 = vmatmul.mubr.bf16.gmra.mrb[0].mxu0 %v558
    %v757 = vpop.f32.mrb[0].mxu0
    %v758 = vadd.f32 0.0, %v757
    %v759 = vpop.f32.mrb[0].mxu0
    %v760 = vadd.f32 0.0, %v759
    %v761 = vpop.f32.mrb[0].mxu0
    %v762 = vadd.f32 0.0, %v761
    %v763 = vpop.f32.mrb[0].mxu0
    %v764 = vadd.f32 0.0, %v763
    %765 = vmatprep.mubr.bf16.mxu0 0
    %766 = vmatmul.mubr.bf16.gmra.mrb[0].mxu0 %v559
    %v767 = vpop.f32.mrb[0].mxu0
    %v768 = vadd.f32 0.0, %v767
    %v769 = vpop.f32.mrb[0].mxu0
    %v770 = vadd.f32 0.0, %v769
    %v771 = vpop.f32.mrb[0].mxu0
    %v772 = vadd.f32 0.0, %v771
    %v773 = vpop.f32.mrb[0].mxu0
    %v774 = vadd.f32 0.0, %v773
    %775 = vmatprep.mubr.bf16.mxu0 0
    %776 = vmatmul.mubr.bf16.gmra.mrb[0].mxu0 %v560
    %v777 = vpop.f32.mrb[0].mxu0
    %v778 = vadd.f32 0.0, %v777
    %v779 = vpop.f32.mrb[0].mxu0
    %v780 = vadd.f32 0.0, %v779
    %v781 = vpop.f32.mrb[0].mxu0
    %v782 = vadd.f32 0.0, %v781
    %v783 = vpop.f32.mrb[0].mxu0
    %v784 = vadd.f32 0.0, %v783
    %785 = vmatprep.mubr.bf16.mxu0 0
    %786 = vmatmul.mubr.bf16.gmra.mrb[0].mxu0 %v561
    %v787 = vpop.f32.mrb[0].mxu0
    %v788 = vadd.f32 0.0, %v787
    %v789 = vpop.f32.mrb[0].mxu0
    %v790 = vadd.f32 0.0, %v789
    %v791 = vpop.f32.mrb[0].mxu0
    %v792 = vadd.f32 0.0, %v791
    %v793 = vpop.f32.mrb[0].mxu0
    %v794 = vadd.f32 0.0, %v793
    %795 = vdwg.mxu0
    %796 = vmatprep.subr.bf16.mxu0 0
    %797 = vmatpush1.bf16.msra.mxu0 %v677
    %798 = vmatprep.subr.bf16.mxu0 0
    %799 = vmatpush1.bf16.msra.mxu0 %v680
    %800 = vmatprep.subr.bf16.mxu0 0
    %801 = vmatpush1.bf16.msra.mxu0 %v683
    %802 = vmatprep.subr.bf16.mxu0 0
    %803 = vmatpush1.bf16.msra.mxu0 %v686
    %804 = vmatprep.subr.bf16.mxu0 0
    %805 = vmatpush1.bf16.msra.mxu0 %v689
    %806 = vmatprep.subr.bf16.mxu0 0
    %807 = vmatpush1.bf16.msra.mxu0 %v692
    %808 = vmatprep.subr.bf16.mxu0 0
    %809 = vmatpush1.bf16.msra.mxu0 %v695
    %810 = vmatprep.subr.bf16.mxu0 0
    %811 = vmatpush1.bf16.msra.mxu0 %v698
    %812 = vmatprep.subr.bf16.mxu0 0
    %813 = vmatpush1.bf16.msra.mxu0 0
    %814 = vmatprep.subr.bf16.mxu0 0
    %815 = vmatpush1.bf16.msra.mxu0 0
    %816 = vmatprep.subr.bf16.mxu0 0
    %817 = vmatpush1.bf16.msra.mxu0 0
    %818 = vmatprep.subr.bf16.mxu0 0
    %819 = vmatpush1.bf16.msra.mxu0 0
    %820 = vmatprep.subr.bf16.mxu0 0
    %821 = vmatpush1.bf16.msra.mxu0 0
    %822 = vmatprep.subr.bf16.mxu0 0
    %823 = vmatpush1.bf16.msra.mxu0 0
    %824 = vmatprep.subr.bf16.mxu0 0
    %825 = vmatpush1.bf16.msra.mxu0 0
    %826 = vmatprep.subr.bf16.mxu0 0
    %827 = vmatpush1.bf16.msra.mxu0 0
    %828 = vmatprep.mubr.bf16.mxu0 0
    %829 = vmatmul.mubr.bf16.gmra.mrb[0].mxu0 %v558
    %v830 = vpop.f32.mrb[0].mxu0
    %v831 = vadd.f32 0.0, %v830
    %v832 = vpop.f32.mrb[0].mxu0
    %v833 = vpop.f32.mrb[0].mxu0
    %v834 = vadd.f32 0.0, %v833
    %v835 = vpop.f32.mrb[0].mxu0
    %836 = vmatprep.mubr.bf16.mxu0 0
    %837 = vmatmul.mubr.bf16.gmra.mrb[0].mxu0 %v559
    %v838 = vpop.f32.mrb[0].mxu0
    %v839 = vadd.f32 0.0, %v838
    %v840 = vpop.f32.mrb[0].mxu0
    %v841 = vpop.f32.mrb[0].mxu0
    %v842 = vadd.f32 0.0, %v841
    %v843 = vpop.f32.mrb[0].mxu0
    %844 = vmatprep.mubr.bf16.mxu0 0
    %845 = vmatmul.mubr.bf16.gmra.mrb[0].mxu0 %v560
    %v846 = vpop.f32.mrb[0].mxu0
    %v847 = vadd.f32 0.0, %v846
    %v848 = vpop.f32.mrb[0].mxu0
    %v849 = vpop.f32.mrb[0].mxu0
    %v850 = vadd.f32 0.0, %v849
    %v851 = vpop.f32.mrb[0].mxu0
    %852 = vmatprep.mubr.bf16.mxu0 0
    %853 = vmatmul.mubr.bf16.gmra.mrb[0].mxu0 %v561
    %v854 = vpop.f32.mrb[0].mxu0
    %v855 = vadd.f32 0.0, %v854
    %v856 = vpop.f32.mrb[0].mxu0
    %v857 = vpop.f32.mrb[0].mxu0
    %v858 = vadd.f32 0.0, %v857
    %v859 = vpop.f32.mrb[0].mxu0
    %860 = vdwg.mxu0
    %v861 = vrot.slane %v758, 7
    %v862 = vrot.slane %v762, 7
    %v863 = vrot.slane %v768, 7
    %v864 = vrot.slane %v772, 7
    %v865 = vrot.slane %v778, 7
    %v866 = vrot.slane %v782, 7
    %v867 = vrot.slane %v788, 7
    %v868 = vrot.slane %v792, 7
    %v869 = vsel %vm458, %v867, %v868
    %v870 = vsel %vm458, %v866, %v867
    %v871 = vsel %vm458, %v865, %v866
    %v872 = vsel %vm458, %v864, %v865
    %v873 = vsel %vm458, %v863, %v864
    %v874 = vsel %vm458, %v862, %v863
    %v875 = vsel %vm458, %v861, %v862
    %v876 = vsel %vm458, %v868, %v861
    %v877 = vsel %vm469, 0.0, %v876
    %v878 = vsel %vm470, 0.0, %v875
    %v879 = vsel %vm469, 0.0, %v874
    %v880 = vsel %vm470, 0.0, %v873
    %v881 = vsel %vm469, 0.0, %v872
    %v882 = vsel %vm470, 0.0, %v871
    %v883 = vsel %vm469, 0.0, %v870
    %v884 = vsel %vm470, 0.0, %v869
    %v885 = vadd.f32 %v760, %v877
    %v886 = vadd.f32 %v764, %v878
    %v887 = vadd.f32 %v770, %v879
    %v888 = vadd.f32 %v774, %v880
    %v889 = vadd.f32 %v780, %v881
    %v890 = vadd.f32 %v784, %v882
    %v891 = vadd.f32 %v790, %v883
    %v892 = vadd.f32 %v794, %v884
    %v893 = vrot.slane %v831, 1
    %v894 = vrot.slane %v834, 1
    %v895 = vrot.slane %v839, 1
    %v896 = vrot.slane %v842, 1
    %v897 = vrot.slane %v847, 1
    %v898 = vrot.slane %v850, 1
    %v899 = vrot.slane %v855, 1
    %v900 = vrot.slane %v858, 1
    %v901 = vsel %vm495, %v899, %v900
    %v902 = vsel %vm495, %v898, %v899
    %v903 = vsel %vm495, %v897, %v898
    %v904 = vsel %vm495, %v896, %v897
    %v905 = vsel %vm495, %v895, %v896
    %v906 = vsel %vm495, %v894, %v895
    %v907 = vsel %vm495, %v893, %v894
    %v908 = vsel %vm495, %v900, %v893
    %v909 = vsel %vm506, 0.0, %v907
    %v910 = vsel %vm507, 0.0, %v906
    %v911 = vsel %vm506, 0.0, %v905
    %v912 = vsel %vm507, 0.0, %v904
    %v913 = vsel %vm506, 0.0, %v903
    %v914 = vsel %vm507, 0.0, %v902
    %v915 = vsel %vm506, 0.0, %v901
    %v916 = vsel %vm507, 0.0, %v908
    %v917 = vadd.f32 %v885, %v909
    %v918 = vadd.f32 %v886, %v910
    %v919 = vadd.f32 %v887, %v911
    %v920 = vadd.f32 %v888, %v912
    %v921 = vadd.f32 %v889, %v913
    %v922 = vadd.f32 %v890, %v914
    %v923 = vadd.f32 %v891, %v915
    %v924 = vadd.f32 %v892, %v916
    %v925 = vld [vmem:[%s4 + $0x1] sm:$0x1]
    %v926 = vlaneseq
    %v927 = vshrl.u32 %v926, 7
    %v928 = vsub.s32 0, %v927
    %v929 = vrot.slane %v925, %v928
    %v930 = vmul.f32 %v917, %v929
    %v931 = vmul.f32 %v918, %v929
    %v932 = vmul.f32 %v919, %v929
    %v933 = vmul.f32 %v920, %v929
    %v934 = vmul.f32 %v921, %v929
    %v935 = vmul.f32 %v922, %v929
    %v936 = vmul.f32 %v923, %v929
    %v937 = vmul.f32 %v924, %v929
    %v938 = vld [vmem:[%s5 + $0x1] sm:$0x1]
    %v939 = vlaneseq
    %v940 = vshrl.u32 %v939, 7
    %v941 = vsub.s32 0, %v940
    %v942 = vrot.slane %v938, %v941
    %v943 = vadd.f32 %v930, %v942
    %v944 = vadd.f32 %v931, %v942
    %v945 = vadd.f32 %v932, %v942
    %v946 = vadd.f32 %v933, %v942
    %v947 = vadd.f32 %v934, %v942
    %v948 = vadd.f32 %v935, %v942
    %v949 = vadd.f32 %v936, %v942
    %v950 = vadd.f32 %v937, %v942
    %v951 = vmax.f32 %v943, 0.0
    %v952 = vmax.f32 %v944, 0.0
    %v953 = vmax.f32 %v945, 0.0
    %v954 = vmax.f32 %v946, 0.0
    %v955 = vmax.f32 %v947, 0.0
    %v956 = vmax.f32 %v948, 0.0
    %v957 = vmax.f32 %v949, 0.0
    %v958 = vmax.f32 %v950, 0.0
    %v959 = vpack.c.bf16 %v952, %v951
    %v960 = vpack.c.bf16 %v954, %v953
    %v961 = vpack.c.bf16 %v956, %v955
    %v962 = vpack.c.bf16 %v958, %v957
    %s963 = scalar_lea.vmem [#allocation2], 384
    %v964 = vld [vmem:[%s963] sm:$0xff]
    %v965 = vld [vmem:[%s963 + $0x8] sm:$0xf]
    %v966 = vld [vmem:[%s963 + $0xc] sm:$0xff]
    %v967 = vld [vmem:[%s963 + $0x14] sm:$0xf]
    %v968 = vld [vmem:[%s963 + $0x18] sm:$0xff]
    %v969 = vld [vmem:[%s963 + $0x20] sm:$0xf]
    %v970 = vld [vmem:[%s963 + $0x24] sm:$0xff]
    %v971 = vld [vmem:[%s963 + $0x2c] sm:$0xf]
    %v972 = vld [vmem:[%s963 + $0x30] sm:$0xff]
    %v973 = vld [vmem:[%s963 + $0x38] sm:$0xf]
    %v974 = vld [vmem:[%s963 + $0x3c] sm:$0xff]
    %v975 = vld [vmem:[%s963 + $0x44] sm:$0xf]
    %v976 = vld [vmem:[%s963 + $0x48] sm:$0xff]
    %v977 = vld [vmem:[%s963 + $0x50] sm:$0xf]
    %v978 = vld [vmem:[%s963 + $0x54] sm:$0xff]
    %v979 = vld [vmem:[%s963 + $0x5c] sm:$0xf]
    %v980 = vld [vmem:[%s963 + $0x60] sm:$0xff]
    %v981 = vld [vmem:[%s963 + $0x68] sm:$0xf]
    %v982 = vld [vmem:[%s963 + $0x6c] sm:$0xff]
    %v983 = vld [vmem:[%s963 + $0x74] sm:$0xf]
    %v984 = vld [vmem:[%s963 + $0x78] sm:$0xff]
    %v985 = vld [vmem:[%s963 + $0x80] sm:$0xf]
    %v986 = vld [vmem:[%s963 + $0x84] sm:$0xff]
    %v987 = vld [vmem:[%s963 + $0x8c] sm:$0xf]
    %v988 = vld [vmem:[%s963 + $0x90] sm:$0xff]
    %v989 = vld [vmem:[%s963 + $0x98] sm:$0xf]
    %v990 = vld [vmem:[%s963 + $0x9c] sm:$0xff]
    %v991 = vld [vmem:[%s963 + $0xa4] sm:$0xf]
    %v992 = vld [vmem:[%s963 + $0xa8] sm:$0xff]
    %v993 = vld [vmem:[%s963 + $0xb0] sm:$0xf]
    %v994 = vld [vmem:[%s963 + $0xb4] sm:$0xff]
    %v995 = vld [vmem:[%s963 + $0xbc] sm:$0xf]
    %v1028 = vunpack.c.l.b16 %v964
    %v1029 = vunpack.c.h.b16 %v964
    %v1030 = vunpack.c.l.b16 %v965
    %v1031 = vunpack.c.l.b16 %v966
    %v1032 = vunpack.c.h.b16 %v966
    %v1033 = vunpack.c.l.b16 %v967
    %v1034 = vunpack.c.l.b16 %v968
    %v1035 = vunpack.c.h.b16 %v968
    %v1036 = vunpack.c.l.b16 %v969
    %v1037 = vunpack.c.l.b16 %v970
    %v1038 = vunpack.c.h.b16 %v970
    %v1039 = vunpack.c.l.b16 %v971
    %v1040 = vunpack.c.l.b16 %v972
    %v1041 = vunpack.c.h.b16 %v972
    %v1042 = vunpack.c.l.b16 %v973
    %v1043 = vunpack.c.l.b16 %v974
    %v1044 = vunpack.c.h.b16 %v974
    %v1045 = vunpack.c.l.b16 %v975
    %v1046 = vunpack.c.l.b16 %v976
    %v1047 = vunpack.c.h.b16 %v976
    %v1048 = vunpack.c.l.b16 %v977
    %v1049 = vunpack.c.l.b16 %v978
    %v1050 = vunpack.c.h.b16 %v978
    %v1051 = vunpack.c.l.b16 %v979
    %v1052 = vunpack.c.l.b16 %v980
    %v1053 = vunpack.c.h.b16 %v980
    %v1054 = vunpack.c.l.b16 %v981
    %v1055 = vunpack.c.l.b16 %v982
    %v1056 = vunpack.c.h.b16 %v982
    %v1057 = vunpack.c.l.b16 %v983
    %v1058 = vunpack.c.l.b16 %v984
    %v1059 = vunpack.c.h.b16 %v984
    %v1060 = vunpack.c.l.b16 %v985
    %v1061 = vunpack.c.l.b16 %v986
    %v1062 = vunpack.c.h.b16 %v986
    %v1063 = vunpack.c.l.b16 %v987
    %v1064 = vunpack.c.l.b16 %v988
    %v1065 = vunpack.c.h.b16 %v988
    %v1066 = vunpack.c.l.b16 %v989
    %v1067 = vunpack.c.l.b16 %v990
    %v1068 = vunpack.c.h.b16 %v990
    %v1069 = vunpack.c.l.b16 %v991
    %v1070 = vunpack.c.l.b16 %v992
    %v1071 = vunpack.c.h.b16 %v992
    %v1072 = vunpack.c.l.b16 %v993
    %v1073 = vunpack.c.l.b16 %v994
    %v1074 = vunpack.c.h.b16 %v994
    %v1075 = vunpack.c.l.b16 %v995
    %v1076 = vpack.c.b16 %v1031, %v1028
    %v1077 = vpack.c.b16 %v1032, %v1029
    %v1078 = vpack.c.b16 %v1033, %v1030
    %v1079 = vpack.c.b16 %v1037, %v1034
    %v1080 = vpack.c.b16 %v1038, %v1035
    %v1081 = vpack.c.b16 %v1039, %v1036
    %v1082 = vpack.c.b16 %v1043, %v1040
    %v1083 = vpack.c.b16 %v1044, %v1041
    %v1084 = vpack.c.b16 %v1045, %v1042
    %v1085 = vpack.c.b16 %v1049, %v1046
    %v1086 = vpack.c.b16 %v1050, %v1047
    %v1087 = vpack.c.b16 %v1051, %v1048
    %v1088 = vpack.c.b16 %v1055, %v1052
    %v1089 = vpack.c.b16 %v1056, %v1053
    %v1090 = vpack.c.b16 %v1057, %v1054
    %v1091 = vpack.c.b16 %v1061, %v1058
    %v1092 = vpack.c.b16 %v1062, %v1059
    %v1093 = vpack.c.b16 %v1063, %v1060
    %v1094 = vpack.c.b16 %v1067, %v1064
    %v1095 = vpack.c.b16 %v1068, %v1065
    %v1096 = vpack.c.b16 %v1069, %v1066
    %v1097 = vpack.c.b16 %v1073, %v1070
    %v1098 = vpack.c.b16 %v1074, %v1071
    %v1099 = vpack.c.b16 %v1075, %v1072
    %1124 = vmatprep.subr.bf16.mxu0 %v1077
    %1125 = vmatpush1.bf16.msra.mxu0 %v1076
    %1126 = vmatprep.subr.bf16.mxu0 %v1080
    %1127 = vmatpush1.bf16.msra.mxu0 %v1079
    %1128 = vmatprep.subr.bf16.mxu0 %v1083
    %1129 = vmatpush1.bf16.msra.mxu0 %v1082
    %1130 = vmatprep.subr.bf16.mxu0 %v1086
    %1131 = vmatpush1.bf16.msra.mxu0 %v1085
    %1132 = vmatprep.subr.bf16.mxu0 %v1089
    %1133 = vmatpush1.bf16.msra.mxu0 %v1088
    %1134 = vmatprep.subr.bf16.mxu0 %v1092
    %1135 = vmatpush1.bf16.msra.mxu0 %v1091
    %1136 = vmatprep.subr.bf16.mxu0 %v1095
    %1137 = vmatpush1.bf16.msra.mxu0 %v1094
    %1138 = vmatprep.subr.bf16.mxu0 %v1098
    %1139 = vmatpush1.bf16.msra.mxu0 %v1097
    %1140 = vmatprep.subr.bf16.mxu0 0
    %1141 = vmatpush1.bf16.msra.mxu0 0
    %1142 = vmatprep.subr.bf16.mxu0 0
    %1143 = vmatpush1.bf16.msra.mxu0 0
    %1144 = vmatprep.subr.bf16.mxu0 0
    %1145 = vmatpush1.bf16.msra.mxu0 0
    %1146 = vmatprep.subr.bf16.mxu0 0
    %1147 = vmatpush1.bf16.msra.mxu0 0
    %1148 = vmatprep.subr.bf16.mxu0 0
    %1149 = vmatpush1.bf16.msra.mxu0 0
    %1150 = vmatprep.subr.bf16.mxu0 0
    %1151 = vmatpush1.bf16.msra.mxu0 0
    %1152 = vmatprep.subr.bf16.mxu0 0
    %1153 = vmatpush1.bf16.msra.mxu0 0
    %1154 = vmatprep.subr.bf16.mxu0 0
    %1155 = vmatpush1.bf16.msra.mxu0 0
    %1156 = vmatprep.mubr.bf16.mxu0 0
    %1157 = vmatmul.mubr.bf16.gmra.mrb[0].mxu0 %v959
    %v1158 = vpop.f32.mrb[0].mxu0
    %v1159 = vadd.f32 0.0, %v1158
    %v1160 = vpop.f32.mrb[0].mxu0
    %v1161 = vadd.f32 0.0, %v1160
    %v1162 = vpop.f32.mrb[0].mxu0
    %v1163 = vadd.f32 0.0, %v1162
    %v1164 = vpop.f32.mrb[0].mxu0
    %v1165 = vadd.f32 0.0, %v1164
    %1166 = vmatprep.mubr.bf16.mxu0 0
    %1167 = vmatmul.mubr.bf16.gmra.mrb[0].mxu0 %v960
    %v1168 = vpop.f32.mrb[0].mxu0
    %v1169 = vadd.f32 0.0, %v1168
    %v1170 = vpop.f32.mrb[0].mxu0
    %v1171 = vadd.f32 0.0, %v1170
    %v1172 = vpop.f32.mrb[0].mxu0
    %v1173 = vadd.f32 0.0, %v1172
    %v1174 = vpop.f32.mrb[0].mxu0
    %v1175 = vadd.f32 0.0, %v1174
    %1176 = vmatprep.mubr.bf16.mxu0 0
    %1177 = vmatmul.mubr.bf16.gmra.mrb[0].mxu0 %v961
    %v1178 = vpop.f32.mrb[0].mxu0
    %v1179 = vadd.f32 0.0, %v1178
    %v1180 = vpop.f32.mrb[0].mxu0
    %v1181 = vadd.f32 0.0, %v1180
    %v1182 = vpop.f32.mrb[0].mxu0
    %v1183 = vadd.f32 0.0, %v1182
    %v1184 = vpop.f32.mrb[0].mxu0
    %v1185 = vadd.f32 0.0, %v1184
    %1186 = vmatprep.mubr.bf16.mxu0 0
    %1187 = vmatmul.mubr.bf16.gmra.mrb[0].mxu0 %v962
    %v1188 = vpop.f32.mrb[0].mxu0
    %v1189 = vadd.f32 0.0, %v1188
    %v1190 = vpop.f32.mrb[0].mxu0
    %v1191 = vadd.f32 0.0, %v1190
    %v1192 = vpop.f32.mrb[0].mxu0
    %v1193 = vadd.f32 0.0, %v1192
    %v1194 = vpop.f32.mrb[0].mxu0
    %v1195 = vadd.f32 0.0, %v1194
    %1196 = vdwg.mxu0
    %1197 = vmatprep.subr.bf16.mxu0 0
    %1198 = vmatpush1.bf16.msra.mxu0 %v1078
    %1199 = vmatprep.subr.bf16.mxu0 0
    %1200 = vmatpush1.bf16.msra.mxu0 %v1081
    %1201 = vmatprep.subr.bf16.mxu0 0
    %1202 = vmatpush1.bf16.msra.mxu0 %v1084
    %1203 = vmatprep.subr.bf16.mxu0 0
    %1204 = vmatpush1.bf16.msra.mxu0 %v1087
    %1205 = vmatprep.subr.bf16.mxu0 0
    %1206 = vmatpush1.bf16.msra.mxu0 %v1090
    %1207 = vmatprep.subr.bf16.mxu0 0
    %1208 = vmatpush1.bf16.msra.mxu0 %v1093
    %1209 = vmatprep.subr.bf16.mxu0 0
    %1210 = vmatpush1.bf16.msra.mxu0 %v1096
    %1211 = vmatprep.subr.bf16.mxu0 0
    %1212 = vmatpush1.bf16.msra.mxu0 %v1099
    %1213 = vmatprep.subr.bf16.mxu0 0
    %1214 = vmatpush1.bf16.msra.mxu0 0
    %1215 = vmatprep.subr.bf16.mxu0 0
    %1216 = vmatpush1.bf16.msra.mxu0 0
    %1217 = vmatprep.subr.bf16.mxu0 0
    %1218 = vmatpush1.bf16.msra.mxu0 0
    %1219 = vmatprep.subr.bf16.mxu0 0
    %1220 = vmatpush1.bf16.msra.mxu0 0
    %1221 = vmatprep.subr.bf16.mxu0 0
    %1222 = vmatpush1.bf16.msra.mxu0 0
    %1223 = vmatprep.subr.bf16.mxu0 0
    %1224 = vmatpush1.bf16.msra.mxu0 0
    %1225 = vmatprep.subr.bf16.mxu0 0
    %1226 = vmatpush1.bf16.msra.mxu0 0
    %1227 = vmatprep.subr.bf16.mxu0 0
    %1228 = vmatpush1.bf16.msra.mxu0 0
    %1229 = vmatprep.mubr.bf16.mxu0 0
    %1230 = vmatmul.mubr.bf16.gmra.mrb[0].mxu0 %v959
    %v1231 = vpop.f32.mrb[0].mxu0
    %v1232 = vadd.f32 0.0, %v1231
    %v1233 = vpop.f32.mrb[0].mxu0
    %v1234 = vpop.f32.mrb[0].mxu0
    %v1235 = vadd.f32 0.0, %v1234
    %v1236 = vpop.f32.mrb[0].mxu0
    %1237 = vmatprep.mubr.bf16.mxu0 0
    %1238 = vmatmul.mubr.bf16.gmra.mrb[0].mxu0 %v960
    %v1239 = vpop.f32.mrb[0].mxu0
    %v1240 = vadd.f32 0.0, %v1239
    %v1241 = vpop.f32.mrb[0].mxu0
    %v1242 = vpop.f32.mrb[0].mxu0
    %v1243 = vadd.f32 0.0, %v1242
    %v1244 = vpop.f32.mrb[0].mxu0
    %1245 = vmatprep.mubr.bf16.mxu0 0
    %1246 = vmatmul.mubr.bf16.gmra.mrb[0].mxu0 %v961
    %v1247 = vpop.f32.mrb[0].mxu0
    %v1248 = vadd.f32 0.0, %v1247
    %v1249 = vpop.f32.mrb[0].mxu0
    %v1250 = vpop.f32.mrb[0].mxu0
    %v1251 = vadd.f32 0.0, %v1250
    %v1252 = vpop.f32.mrb[0].mxu0
    %1253 = vmatprep.mubr.bf16.mxu0 0
    %1254 = vmatmul.mubr.bf16.gmra.mrb[0].mxu0 %v962
    %v1255 = vpop.f32.mrb[0].mxu0
    %v1256 = vadd.f32 0.0, %v1255
    %v1257 = vpop.f32.mrb[0].mxu0
    %v1258 = vpop.f32.mrb[0].mxu0
    %v1259 = vadd.f32 0.0, %v1258
    %v1260 = vpop.f32.mrb[0].mxu0
    %1261 = vdwg.mxu0
    %v1262 = vrot.slane %v1159, 7
    %v1263 = vrot.slane %v1163, 7
    %v1264 = vrot.slane %v1169, 7
    %v1265 = vrot.slane %v1173, 7
    %v1266 = vrot.slane %v1179, 7
    %v1267 = vrot.slane %v1183, 7
    %v1268 = vrot.slane %v1189, 7
    %v1269 = vrot.slane %v1193, 7
    %v1270 = vsel %vm458, %v1268, %v1269
    %v1271 = vsel %vm458, %v1267, %v1268
    %v1272 = vsel %vm458, %v1266, %v1267
    %v1273 = vsel %vm458, %v1265, %v1266
    %v1274 = vsel %vm458, %v1264, %v1265
    %v1275 = vsel %vm458, %v1263, %v1264
    %v1276 = vsel %vm458, %v1262, %v1263
    %v1277 = vsel %vm458, %v1269, %v1262
    %v1278 = vsel %vm469, 0.0, %v1277
    %v1279 = vsel %vm470, 0.0, %v1276
    %v1280 = vsel %vm469, 0.0, %v1275
    %v1281 = vsel %vm470, 0.0, %v1274
    %v1282 = vsel %vm469, 0.0, %v1273
    %v1283 = vsel %vm470, 0.0, %v1272
    %v1284 = vsel %vm469, 0.0, %v1271
    %v1285 = vsel %vm470, 0.0, %v1270
    %v1286 = vadd.f32 %v1161, %v1278
    %v1287 = vadd.f32 %v1165, %v1279
    %v1288 = vadd.f32 %v1171, %v1280
    %v1289 = vadd.f32 %v1175, %v1281
    %v1290 = vadd.f32 %v1181, %v1282
    %v1291 = vadd.f32 %v1185, %v1283
    %v1292 = vadd.f32 %v1191, %v1284
    %v1293 = vadd.f32 %v1195, %v1285
    %v1294 = vrot.slane %v1232, 1
    %v1295 = vrot.slane %v1235, 1
    %v1296 = vrot.slane %v1240, 1
    %v1297 = vrot.slane %v1243, 1
    %v1298 = vrot.slane %v1248, 1
    %v1299 = vrot.slane %v1251, 1
    %v1300 = vrot.slane %v1256, 1
    %v1301 = vrot.slane %v1259, 1
    %v1302 = vsel %vm495, %v1300, %v1301
    %v1303 = vsel %vm495, %v1299, %v1300
    %v1304 = vsel %vm495, %v1298, %v1299
    %v1305 = vsel %vm495, %v1297, %v1298
    %v1306 = vsel %vm495, %v1296, %v1297
    %v1307 = vsel %vm495, %v1295, %v1296
    %v1308 = vsel %vm495, %v1294, %v1295
    %v1309 = vsel %vm495, %v1301, %v1294
    %v1310 = vsel %vm506, 0.0, %v1308
    %v1311 = vsel %vm507, 0.0, %v1307
    %v1312 = vsel %vm506, 0.0, %v1306
    %v1313 = vsel %vm507, 0.0, %v1305
    %v1314 = vsel %vm506, 0.0, %v1304
    %v1315 = vsel %vm507, 0.0, %v1303
    %v1316 = vsel %vm506, 0.0, %v1302
    %v1317 = vsel %vm507, 0.0, %v1309
    %v1318 = vadd.f32 %v1286, %v1310
    %v1319 = vadd.f32 %v1287, %v1311
    %v1320 = vadd.f32 %v1288, %v1312
    %v1321 = vadd.f32 %v1289, %v1313
    %v1322 = vadd.f32 %v1290, %v1314
    %v1323 = vadd.f32 %v1291, %v1315
    %v1324 = vadd.f32 %v1292, %v1316
    %v1325 = vadd.f32 %v1293, %v1317
    %v1326 = vld [vmem:[%s4 + $0x2] sm:$0x1]
    %v1327 = vlaneseq
    %v1328 = vshrl.u32 %v1327, 7
    %v1329 = vsub.s32 0, %v1328
    %v1330 = vrot.slane %v1326, %v1329
    %v1331 = vmul.f32 %v1318, %v1330
    %v1332 = vmul.f32 %v1319, %v1330
    %v1333 = vmul.f32 %v1320, %v1330
    %v1334 = vmul.f32 %v1321, %v1330
    %v1335 = vmul.f32 %v1322, %v1330
    %v1336 = vmul.f32 %v1323, %v1330
    %v1337 = vmul.f32 %v1324, %v1330
    %v1338 = vmul.f32 %v1325, %v1330
    %v1339 = vld [vmem:[%s5 + $0x2] sm:$0x1]
    %v1340 = vlaneseq
    %v1341 = vshrl.u32 %v1340, 7
    %v1342 = vsub.s32 0, %v1341
    %v1343 = vrot.slane %v1339, %v1342
    %v1344 = vadd.f32 %v1331, %v1343
    %v1345 = vadd.f32 %v1332, %v1343
    %v1346 = vadd.f32 %v1333, %v1343
    %v1347 = vadd.f32 %v1334, %v1343
    %v1348 = vadd.f32 %v1335, %v1343
    %v1349 = vadd.f32 %v1336, %v1343
    %v1350 = vadd.f32 %v1337, %v1343
    %v1351 = vadd.f32 %v1338, %v1343
    %v1352 = vmax.f32 %v1344, 0.0
    %v1353 = vmax.f32 %v1345, 0.0
    %v1354 = vmax.f32 %v1346, 0.0
    %v1355 = vmax.f32 %v1347, 0.0
    %v1356 = vmax.f32 %v1348, 0.0
    %v1357 = vmax.f32 %v1349, 0.0
    %v1358 = vmax.f32 %v1350, 0.0
    %v1359 = vmax.f32 %v1351, 0.0
    %1360 = vst [vmem:[#allocation5] sm:$0xff] %v1352
    %1361 = vst [vmem:[#allocation5 + $0x8] sm:$0xff] %v1353
    %1362 = vst [vmem:[#allocation5 + $0x10] sm:$0xff] %v1354
    %1363 = vst [vmem:[#allocation5 + $0x18] sm:$0xff] %v1355
    %1364 = vst [vmem:[#allocation5 + $0x20] sm:$0xff] %v1356
    %1365 = vst [vmem:[#allocation5 + $0x28] sm:$0xff] %v1357
    %1366 = vst [vmem:[#allocation5 + $0x30] sm:$0xff] %v1358
    %1367 = vst [vmem:[#allocation5 + $0x38] sm:$0xff] %v1359
    // Predicated region
    $region30: #{tpu_custom_call.1} parent=1 // pred_check
      _
    $region31: #{tpu_custom_call.1} parent=1 // pred_check_branch
      %1369 = sbr.rel (0) target = $region33
    $region32: #{tpu_custom_call.1} parent=1 // pred_region
      %s1371 = ssub.s32 1024, 1024
      %1372 = vsyncadd [#allocation4], %s1371
      %s1373 = sshll.u32 [#allocation5], 4
      %s1374 = int_to_ptr.vmem [resolvable:$true] %s1373
      %1379 = dma.vmem_to_hbm [thread:$0]  %s1374, 1024, %s6, [#allocation4], 128, 128, 8
    $region33: #{tpu_custom_call.1} parent=1 // pred_fallthru
      _
    // Predicated region
    $region34: #{tpu_custom_call.1} parent=1 // pred_check
      _
    $region35: #{tpu_custom_call.1} parent=1 // pred_check_branch
      %1381 = sbr.rel (0) target = $region37
    $region36: #{tpu_custom_call.1} parent=1 // pred_region
      %1382 = dma.done [#allocation4], 1024
    $region37: #{tpu_custom_call.1} parent=1 // pred_fallthru
      _
    %1383 = vsyncpa [#allocation3], 1
    %1384 = vsyncpa [#allocation4], 1

</llo_original>
